<compile_context>
chip_gen: v5e
topology: v5e:2x2
jax: 0.10.0
libtpu: 0.0.40
codegen_flags: <defaults>
</compile_context>

<pallas_src>
import functools

import jax
import jax.numpy as jnp
from jax.experimental import pallas as pl
from jax.experimental.pallas import tpu as pltpu

DEPTH = 3
LN_EPS = 1e-5
PAD_NEG = -1e9          # mask value for wrapper-added pad vectors (masked max-pool)
FINAL_PAD_NEG = -1e30   # penalty excluding wrapper-added pad vectors from the final max


def _subgraph_kernel(x_ref, mask_ref, w0_ref, wtop_ref, wbot_ref, lnp_ref, out_ref,
                     *, valid_len, mxu_dtype):
    # x_ref:    (TILE_N * L, H)   flattened vectors for TILE_N polylines (mxu_dtype)
    # mask_ref: (TILE_N, L)       additive mask, f32 (-1e4 on padded vectors)
    # w0_ref:   (H, Hc)           layer-0 weight (mxu_dtype)
    # wtop_ref: (DEPTH-1, Hc, Hc) later-layer weight rows hitting `enc` (mxu_dtype)
    # wbot_ref: (DEPTH-1, Hc, Hc) later-layer weight rows hitting the pooled half
    # lnp_ref:  (3*DEPTH, Hc)     rows [0:D)=bias, [D:2D)=gamma, [2D:3D)=beta (f32)
    # out_ref:  (TILE_N, H)       f32
    tile_n, L = mask_ref.shape
    M, _ = x_ref.shape
    Hc = w0_ref.shape[1]

    lnp = lnp_ref[...]                                         # (3*DEPTH, Hc) f32

    # Hoisted mask broadcast, reused by every masked max-pool (no per-layer re-broadcast).
    mask_b = jnp.broadcast_to(mask_ref[...][:, :, None], (tile_n, L, Hc))

    # Static penalty that removes wrapper-added pad rows (row >= valid_len) from the
    # final UNMASKED max.  enc is post-ReLU (>= 0) so real rows always win exactly.
    if valid_len < L:
        row_ids = jax.lax.broadcasted_iota(jnp.int32, (1, L, 1), 1)
        pad_pen = jnp.where(row_ids < valid_len, 0.0, FINAL_PAD_NEG).astype(jnp.float32)
    else:
        pad_pen = None

    def ln_relu(y, layer):
        g = lnp[DEPTH + layer:DEPTH + layer + 1, :]            # (1, Hc)
        beta = lnp[2 * DEPTH + layer:2 * DEPTH + layer + 1, :]  # (1, Hc)
        mu = jnp.mean(y, axis=-1, keepdims=True)
        d = y - mu
        var = jnp.mean(d * d, axis=-1, keepdims=True)
        y = d * jax.lax.rsqrt(var + LN_EPS) * g + beta
        return jnp.maximum(y, 0.0)

    # ---- layer 0: operates on the raw [M, H] features ----
    y = jnp.dot(x_ref[...], w0_ref[...],
                preferred_element_type=jnp.float32) + lnp[0:1, :]
    enc = ln_relu(y, 0)                                        # [M, Hc] f32
    enc3 = enc.reshape(tile_n, L, Hc)                          # free view (L % 8 == 0)
    maxh = jnp.maximum(jnp.max(enc3 + mask_b, axis=1), 0.0)    # [TILE_N, Hc]

    # ---- layers 1..DEPTH-1: split-weight form of concat([enc, broadcast(maxh)]) @ W ----
    for l in range(1, DEPTH):
        top = jnp.dot(enc.astype(mxu_dtype), wtop_ref[l - 1],
                      preferred_element_type=jnp.float32)      # [M, Hc]
        bot = jnp.dot(maxh.astype(mxu_dtype), wbot_ref[l - 1],
                      preferred_element_type=jnp.float32)      # [TILE_N, Hc]
        y3 = top.reshape(tile_n, L, Hc) + bot[:, None, :] + lnp[l:l + 1, :]
        enc3 = ln_relu(y3, l)                                  # [TILE_N, L, Hc]
        enc = enc3.reshape(M, Hc)
        maxh = jnp.maximum(jnp.max(enc3 + mask_b, axis=1), 0.0)

    # Final (unmasked over the ORIGINAL L rows) max over vectors.  The broadcast half's
    # max over L is maxh itself.  Two direct slice stores instead of a lane-axis concat.
    final_enc = enc3 if pad_pen is None else enc3 + pad_pen
    out_ref[:, :Hc] = jnp.max(final_enc, axis=1)
    out_ref[:, Hc:] = maxh


def _pick_tile_n(N, L_pad, *, target_rows=2048, min_steps=2):
    """Largest divisor of N that is layout-legal (multiple of 8 or the full batch),
    keeps TILE_N * L_pad <= target_rows, and leaves at least `min_steps` grid steps
    (so both v7x TensorCores get work).  If nothing fits the row budget the smallest
    legal tile is used (explicit clamp, never silently larger than necessary)."""
    cands = [t for t in range(1, N + 1) if N % t == 0 and (t % 8 == 0 or t == N)]
    multi = [t for t in cands if N // t >= min_steps]
    pool = multi if multi else cands
    fitting = [t for t in pool if t * L_pad <= target_rows]
    return max(fitting) if fitting else min(pool)


def subgraph_forward(hidden_states, attention_mask, poly_num, params,
                     *, tile_n=None, mxu_dtype=jnp.bfloat16):
    """hidden_states: [N, L, H] f32.
    attention_mask: [N, L] additive mask (or [N, L, Hc]; it MUST be constant along the
                    feature axis, as in VectorNet — only [:, :, 0] is used).
    poly_num: unused (see TODO above).
    mxu_dtype: dtype of activations/weights fed to the MXU (default bf16; accumulation
               and all elementwise math stay f32).
    """
    del poly_num
    weights, biases, gammas, betas = params
    N, L, H = hidden_states.shape
    Hc = H // 2
    assert weights.shape == (DEPTH, H, Hc)

    if attention_mask.ndim == 3:
        # NOTE: assumed feature-constant (true for VectorNet); reduced to [N, L].
        attention_mask = attention_mask[:, :, 0]
    attention_mask = attention_mask.astype(jnp.float32)

    # Pad L to a multiple of 8 so the kernel's 2D<->3D reshapes are free layout views.
    L_pad = ((L + 7) // 8) * 8
    if L_pad != L:
        hidden_states = jnp.pad(hidden_states, ((0, 0), (0, L_pad - L), (0, 0)))
        attention_mask = jnp.pad(attention_mask, ((0, 0), (0, L_pad - L)),
                                 constant_values=PAD_NEG)

    if tile_n is None:
        tile_n = _pick_tile_n(N, L_pad)
    assert N % tile_n == 0, "tile_n must divide the polyline batch size"
    assert tile_n % 8 == 0 or tile_n == N, "tile_n must be a multiple of 8 (or N)"

    # bf16 (or f32) operands straight from HBM: halves the dominant activation DMA.
    x_flat = hidden_states.reshape(N * L_pad, H).astype(mxu_dtype)
    w0 = weights[0].astype(mxu_dtype)                 # [H, Hc]
    wtop = weights[1:, :Hc, :].astype(mxu_dtype)      # [DEPTH-1, Hc, Hc]
    wbot = weights[1:, Hc:, :].astype(mxu_dtype)      # [DEPTH-1, Hc, Hc]
    # bias / gamma / beta packed into one [3*DEPTH, Hc] f32 slab (one DMA, one buffer).
    lnp = jnp.concatenate([biases[:, 0, :], gammas[:, 0, :], betas[:, 0, :]],
                          axis=0).astype(jnp.float32)

    # Explicit VMEM budget derived from the (double-buffered) block sizes.
    in_isz = jnp.dtype(mxu_dtype).itemsize
    block_bytes = (tile_n * L_pad * H * in_isz          # x
                   + tile_n * L_pad * 4                 # mask
                   + tile_n * H * 4                     # out
                   + H * Hc * in_isz                    # w0
                   + 2 * (DEPTH - 1) * Hc * Hc * in_isz  # wtop + wbot
                   + 3 * DEPTH * Hc * 4)                # lnp
    vmem_limit = int(min(100 * 2**20, max(32 * 2**20, 4 * block_bytes)))

    kernel = functools.partial(_subgraph_kernel, valid_len=L, mxu_dtype=mxu_dtype)
    out = pl.pallas_call(
        kernel,
        out_shape=jax.ShapeDtypeStruct((N, H), jnp.float32),
        grid=(N // tile_n,),
        in_specs=[
            pl.BlockSpec((tile_n * L_pad, H), lambda n: (n, 0)),
            pl.BlockSpec((tile_n, L_pad), lambda n: (n, 0)),
            pl.BlockSpec((H, Hc), lambda n: (0, 0)),
            pl.BlockSpec((DEPTH - 1, Hc, Hc), lambda n: (0, 0, 0)),
            pl.BlockSpec((DEPTH - 1, Hc, Hc), lambda n: (0, 0, 0)),
            pl.BlockSpec((3 * DEPTH, Hc), lambda n: (0, 0)),
        ],
        out_specs=pl.BlockSpec((tile_n, H), lambda n: (n, 0)),
        compiler_params=pltpu.CompilerParams(
            dimension_semantics=("parallel",),
            vmem_limit_bytes=vmem_limit),
    )(x_flat, attention_mask, w0, wtop, wbot, lnp)
    return out


def init_params(key, hidden_size):
    Hc = hidden_size // 2
    kw, kb = jax.random.split(key)
    weights = 0.02 * jax.random.normal(kw, (DEPTH, hidden_size, Hc), jnp.float32)
    biases = 0.01 * jax.random.normal(kb, (DEPTH, 1, Hc), jnp.float32)
    gammas = jnp.ones((DEPTH, 1, Hc), jnp.float32)
    betas = jnp.zeros((DEPTH, 1, Hc), jnp.float32)
    return weights, biases, gammas, betas


def subgraph_reference(hidden_states, attention_mask, params):
    """Pure-JAX reference mirroring the PyTorch _train path (concat/broadcast form)."""
    weights, biases, gammas, betas = params
    N, L, H = hidden_states.shape
    Hc = H // 2
    if attention_mask.ndim == 2:
        attention_mask = attention_mask[:, :, None]
    attention_mask = jnp.broadcast_to(attention_mask, (N, L, Hc))
    x = hidden_states
    for l in range(DEPTH):
        y = x @ weights[l] + biases[l]
        mu = jnp.mean(y, axis=-1, keepdims=True)
        var = jnp.mean((y - mu) ** 2, axis=-1, keepdims=True)
        y = (y - mu) / jnp.sqrt(var + LN_EPS) * gammas[l] + betas[l]
        enc = jax.nn.relu(y)
        max_h = jax.nn.relu(jnp.max(enc + attention_mask, axis=1, keepdims=True))
        max_h = jnp.broadcast_to(max_h, enc.shape)
        x = jnp.concatenate([enc, max_h], axis=-1)
    return jnp.max(x, axis=1)


def _make_inputs(key, N, L, H, n_pad_vectors=2):
    hidden_states = jax.random.normal(key, (N, L, H), jnp.float32)
    valid = (jnp.arange(L) < (L - n_pad_vectors)).astype(jnp.float32)          # [L]
    attention_mask = jnp.broadcast_to((1.0 - valid) * -10000.0, (N, L)).astype(jnp.float32)
    return hidden_states, attention_mask


if __name__ == "__main__":
    H = 32                         # hidden size -> Hc = 16
    key = jax.random.PRNGKey(0)
    k_param, k_x1, k_x2 = jax.random.split(key, 3)
    params = init_params(k_param, H)
    poly_num = jnp.array([16], dtype=jnp.int32)

    # Case 1: N=16, L=8 (L already a multiple of 8; auto tile_n=8 -> 2 grid steps).
    hs1, am1 = _make_inputs(k_x1, N=16, L=8, H=H)
    ref1 = subgraph_reference(hs1, am1, params)

    out_f32 = subgraph_forward(hs1, am1, poly_num, params, mxu_dtype=jnp.float32)
    out_f32 = jax.block_until_ready(out_f32)
    assert out_f32.shape == (16, H)
    assert jnp.allclose(out_f32, ref1, atol=1e-4, rtol=1e-4), "mismatch vs reference (f32)"

    out_bf16 = subgraph_forward(hs1, am1, poly_num, params)      # default bf16 operands
    out_bf16 = jax.block_until_ready(out_bf16)
    assert jnp.allclose(out_bf16, ref1, atol=5e-2, rtol=5e-2), "mismatch vs reference (bf16)"

    # Case 2: N=16, L=6 (exercises the wrapper's L->8 padding + final-max pad penalty).
    hs2, am2 = _make_inputs(k_x2, N=16, L=6, H=H, n_pad_vectors=1)
    ref2 = subgraph_reference(hs2, am2, params)
    out_pad = subgraph_forward(hs2, am2, poly_num, params, mxu_dtype=jnp.float32)
    out_pad = jax.block_until_ready(out_pad)
    assert out_pad.shape == (16, H)
    assert jnp.allclose(out_pad, ref2, atol=1e-4, rtol=1e-4), "mismatch vs reference (L padded)"

    print("KERNEL_OK")
</pallas_src>

<mosaic_0001>
module attributes {stable_mosaic.version = 11 : i64} {
  func.func @_subgraph_kernel(%arg0: i32, %arg1: memref<64x32xf32, #tpu.memory_space<vmem>>, %arg2: memref<8x8xf32, #tpu.memory_space<vmem>>, %arg3: memref<32x16xf32, #tpu.memory_space<vmem>>, %arg4: memref<2x16x16xf32, #tpu.memory_space<vmem>>, %arg5: memref<2x16x16xf32, #tpu.memory_space<vmem>>, %arg6: memref<9x16xf32, #tpu.memory_space<vmem>>, %arg7: memref<8x32xf32, #tpu.memory_space<vmem>>) attributes {dimension_semantics = [#tpu.dimension_semantics<parallel>], iteration_bounds = array<i64: 2>, scalar_prefetch = 0 : i64, scratch_operands = 0 : i64, tpu.core_type = #tpu.core_type<tc>, window_params = [{transform_indices = @transform_0, window_bounds = array<i64: 64, 32>}, {transform_indices = @transform_1, window_bounds = array<i64: 8, 8>}, {pipeline_mode = #tpu.pipeline_mode<synchronous>, transform_indices = @transform_2, window_bounds = array<i64: 32, 16>}, {pipeline_mode = #tpu.pipeline_mode<synchronous>, transform_indices = @transform_3, window_bounds = array<i64: 2, 16, 16>}, {pipeline_mode = #tpu.pipeline_mode<synchronous>, transform_indices = @transform_4, window_bounds = array<i64: 2, 16, 16>}, {pipeline_mode = #tpu.pipeline_mode<synchronous>, transform_indices = @transform_5, window_bounds = array<i64: 9, 16>}, {transform_indices = @transform_6, window_bounds = array<i64: 8, 32>}]} {
    %c0 = arith.constant 0 : index
    %c0_0 = arith.constant 0 : index
    %0 = vector.load %arg6[%c0, %c0_0] : memref<9x16xf32, #tpu.memory_space<vmem>>, vector<9x16xf32>
    %c0_1 = arith.constant 0 : index
    %c0_2 = arith.constant 0 : index
    %1 = vector.load %arg2[%c0_1, %c0_2] : memref<8x8xf32, #tpu.memory_space<vmem>>, vector<8x8xf32>
    %2 = vector.shape_cast %1 : vector<8x8xf32> to vector<8x8x1xf32>
    %3 = vector.shape_cast %2 : vector<8x8x1xf32> to vector<8x8x1xf32>
    %4 = vector.broadcast %3 : vector<8x8x1xf32> to vector<8x8x16xf32>
    %c0_3 = arith.constant 0 : index
    %c0_4 = arith.constant 0 : index
    %5 = vector.load %arg1[%c0_3, %c0_4] : memref<64x32xf32, #tpu.memory_space<vmem>>, vector<64x32xf32>
    %c0_5 = arith.constant 0 : index
    %c0_6 = arith.constant 0 : index
    %6 = vector.load %arg3[%c0_5, %c0_6] : memref<32x16xf32, #tpu.memory_space<vmem>>, vector<32x16xf32>
    %cst = arith.constant dense<0.000000e+00> : vector<64x16xf32>
    %7 = tpu.matmul %5, %6, %cst {dimension_numbers = #tpu.dot_dimension_numbers<[1], [0], [0], [1], [0, 0, 1, 1], [], []>} : vector<64x32xf32>, vector<32x16xf32>, vector<64x16xf32> -> vector<64x16xf32>
    %8 = vector.extract_strided_slice %0 {offsets = [0, 0], sizes = [1, 16], strides = [1, 1]} : vector<9x16xf32> to vector<1x16xf32>
    %9 = vector.broadcast %8 : vector<1x16xf32> to vector<64x16xf32>
    %10 = arith.addf %7, %9 : vector<64x16xf32>
    %11 = vector.extract_strided_slice %0 {offsets = [3, 0], sizes = [1, 16], strides = [1, 1]} : vector<9x16xf32> to vector<1x16xf32>
    %12 = vector.extract_strided_slice %0 {offsets = [6, 0], sizes = [1, 16], strides = [1, 1]} : vector<9x16xf32> to vector<1x16xf32>
    %cst_7 = arith.constant dense<0.000000e+00> : vector<64xf32>
    %13 = vector.multi_reduction <add>, %10, %cst_7 [1] : vector<64x16xf32> to vector<64xf32>
    %14 = vector.shape_cast %13 : vector<64xf32> to vector<64x1xf32>
    %cst_8 = arith.constant 1.600000e+01 : f32
    %15 = vector.broadcast %cst_8 : f32 to vector<64x1xf32>
    %16 = arith.divf %14, %15 : vector<64x1xf32>
    %17 = vector.broadcast %16 : vector<64x1xf32> to vector<64x16xf32>
    %18 = arith.subf %10, %17 : vector<64x16xf32>
    %19 = arith.mulf %18, %18 : vector<64x16xf32>
    %cst_9 = arith.constant dense<0.000000e+00> : vector<64xf32>
    %20 = vector.multi_reduction <add>, %19, %cst_9 [1] : vector<64x16xf32> to vector<64xf32>
    %21 = vector.shape_cast %20 : vector<64xf32> to vector<64x1xf32>
    %cst_10 = arith.constant 1.600000e+01 : f32
    %22 = vector.broadcast %cst_10 : f32 to vector<64x1xf32>
    %23 = arith.divf %21, %22 : vector<64x1xf32>
    %cst_11 = arith.constant 9.99999974E-6 : f32
    %24 = vector.broadcast %cst_11 : f32 to vector<64x1xf32>
    %25 = arith.addf %23, %24 : vector<64x1xf32>
    %26 = math.rsqrt %25 : vector<64x1xf32>
    %27 = vector.broadcast %26 : vector<64x1xf32> to vector<64x16xf32>
    %28 = arith.mulf %18, %27 : vector<64x16xf32>
    %29 = vector.broadcast %11 : vector<1x16xf32> to vector<64x16xf32>
    %30 = arith.mulf %28, %29 : vector<64x16xf32>
    %31 = vector.broadcast %12 : vector<1x16xf32> to vector<64x16xf32>
    %32 = arith.addf %30, %31 : vector<64x16xf32>
    %cst_12 = arith.constant 0.000000e+00 : f32
    %33 = vector.broadcast %cst_12 : f32 to vector<64x16xf32>
    %34 = arith.maximumf %32, %33 : vector<64x16xf32>
    %35 = vector.shape_cast %34 : vector<64x16xf32> to vector<8x8x16xf32>
    %36 = arith.addf %35, %4 : vector<8x8x16xf32>
    %cst_13 = arith.constant dense<0xFF800000> : vector<8x16xf32>
    %37 = vector.multi_reduction <maximumf>, %36, %cst_13 [1] : vector<8x8x16xf32> to vector<8x16xf32>
    %cst_14 = arith.constant 0.000000e+00 : f32
    %38 = vector.broadcast %cst_14 : f32 to vector<8x16xf32>
    %39 = arith.maximumf %37, %38 : vector<8x16xf32>
    %c0_15 = arith.constant 0 : index
    %c0_16 = arith.constant 0 : index
    %c0_17 = arith.constant 0 : index
    %40 = vector.load %arg4[%c0_15, %c0_16, %c0_17] : memref<2x16x16xf32, #tpu.memory_space<vmem>>, vector<1x16x16xf32>
    %41 = vector.shape_cast %40 : vector<1x16x16xf32> to vector<16x16xf32>
    %cst_18 = arith.constant dense<0.000000e+00> : vector<64x16xf32>
    %42 = tpu.matmul %34, %41, %cst_18 {dimension_numbers = #tpu.dot_dimension_numbers<[1], [0], [0], [1], [0, 0, 1, 1], [], []>} : vector<64x16xf32>, vector<16x16xf32>, vector<64x16xf32> -> vector<64x16xf32>
    %c0_19 = arith.constant 0 : index
    %c0_20 = arith.constant 0 : index
    %c0_21 = arith.constant 0 : index
    %43 = vector.load %arg5[%c0_19, %c0_20, %c0_21] : memref<2x16x16xf32, #tpu.memory_space<vmem>>, vector<1x16x16xf32>
    %44 = vector.shape_cast %43 : vector<1x16x16xf32> to vector<16x16xf32>
    %cst_22 = arith.constant dense<0.000000e+00> : vector<8x16xf32>
    %45 = tpu.matmul %39, %44, %cst_22 {dimension_numbers = #tpu.dot_dimension_numbers<[1], [0], [0], [1], [0, 0, 1, 1], [], []>} : vector<8x16xf32>, vector<16x16xf32>, vector<8x16xf32> -> vector<8x16xf32>
    %46 = vector.shape_cast %42 : vector<64x16xf32> to vector<8x8x16xf32>
    %47 = vector.shape_cast %45 : vector<8x16xf32> to vector<8x1x16xf32>
    %48 = vector.broadcast %47 : vector<8x1x16xf32> to vector<8x8x16xf32>
    %49 = arith.addf %46, %48 : vector<8x8x16xf32>
    %50 = vector.extract_strided_slice %0 {offsets = [1, 0], sizes = [1, 16], strides = [1, 1]} : vector<9x16xf32> to vector<1x16xf32>
    %51 = vector.shape_cast %50 : vector<1x16xf32> to vector<1x1x16xf32>
    %52 = vector.broadcast %51 : vector<1x1x16xf32> to vector<8x8x16xf32>
    %53 = arith.addf %49, %52 : vector<8x8x16xf32>
    %54 = vector.extract_strided_slice %0 {offsets = [4, 0], sizes = [1, 16], strides = [1, 1]} : vector<9x16xf32> to vector<1x16xf32>
    %55 = vector.extract_strided_slice %0 {offsets = [7, 0], sizes = [1, 16], strides = [1, 1]} : vector<9x16xf32> to vector<1x16xf32>
    %cst_23 = arith.constant dense<0.000000e+00> : vector<8x8xf32>
    %56 = vector.multi_reduction <add>, %53, %cst_23 [2] : vector<8x8x16xf32> to vector<8x8xf32>
    %57 = vector.shape_cast %56 : vector<8x8xf32> to vector<8x8x1xf32>
    %cst_24 = arith.constant 1.600000e+01 : f32
    %58 = vector.broadcast %cst_24 : f32 to vector<8x8x1xf32>
    %59 = arith.divf %57, %58 : vector<8x8x1xf32>
    %60 = vector.broadcast %59 : vector<8x8x1xf32> to vector<8x8x16xf32>
    %61 = arith.subf %53, %60 : vector<8x8x16xf32>
    %62 = arith.mulf %61, %61 : vector<8x8x16xf32>
    %cst_25 = arith.constant dense<0.000000e+00> : vector<8x8xf32>
    %63 = vector.multi_reduction <add>, %62, %cst_25 [2] : vector<8x8x16xf32> to vector<8x8xf32>
    %64 = vector.shape_cast %63 : vector<8x8xf32> to vector<8x8x1xf32>
    %cst_26 = arith.constant 1.600000e+01 : f32
    %65 = vector.broadcast %cst_26 : f32 to vector<8x8x1xf32>
    %66 = arith.divf %64, %65 : vector<8x8x1xf32>
    %cst_27 = arith.constant 9.99999974E-6 : f32
    %67 = vector.broadcast %cst_27 : f32 to vector<8x8x1xf32>
    %68 = arith.addf %66, %67 : vector<8x8x1xf32>
    %69 = math.rsqrt %68 : vector<8x8x1xf32>
    %70 = vector.broadcast %69 : vector<8x8x1xf32> to vector<8x8x16xf32>
    %71 = arith.mulf %61, %70 : vector<8x8x16xf32>
    %72 = vector.shape_cast %54 : vector<1x16xf32> to vector<1x1x16xf32>
    %73 = vector.broadcast %72 : vector<1x1x16xf32> to vector<8x8x16xf32>
    %74 = arith.mulf %71, %73 : vector<8x8x16xf32>
    %75 = vector.shape_cast %55 : vector<1x16xf32> to vector<1x1x16xf32>
    %76 = vector.broadcast %75 : vector<1x1x16xf32> to vector<8x8x16xf32>
    %77 = arith.addf %74, %76 : vector<8x8x16xf32>
    %cst_28 = arith.constant 0.000000e+00 : f32
    %78 = vector.broadcast %cst_28 : f32 to vector<8x8x16xf32>
    %79 = arith.maximumf %77, %78 : vector<8x8x16xf32>
    %80 = vector.shape_cast %79 : vector<8x8x16xf32> to vector<64x16xf32>
    %81 = arith.addf %79, %4 : vector<8x8x16xf32>
    %cst_29 = arith.constant dense<0xFF800000> : vector<8x16xf32>
    %82 = vector.multi_reduction <maximumf>, %81, %cst_29 [1] : vector<8x8x16xf32> to vector<8x16xf32>
    %cst_30 = arith.constant 0.000000e+00 : f32
    %83 = vector.broadcast %cst_30 : f32 to vector<8x16xf32>
    %84 = arith.maximumf %82, %83 : vector<8x16xf32>
    %c1 = arith.constant 1 : index
    %c0_31 = arith.constant 0 : index
    %c0_32 = arith.constant 0 : index
    %85 = vector.load %arg4[%c1, %c0_31, %c0_32] : memref<2x16x16xf32, #tpu.memory_space<vmem>>, vector<1x16x16xf32>
    %86 = vector.shape_cast %85 : vector<1x16x16xf32> to vector<16x16xf32>
    %cst_33 = arith.constant dense<0.000000e+00> : vector<64x16xf32>
    %87 = tpu.matmul %80, %86, %cst_33 {dimension_numbers = #tpu.dot_dimension_numbers<[1], [0], [0], [1], [0, 0, 1, 1], [], []>} : vector<64x16xf32>, vector<16x16xf32>, vector<64x16xf32> -> vector<64x16xf32>
    %c1_34 = arith.constant 1 : index
    %c0_35 = arith.constant 0 : index
    %c0_36 = arith.constant 0 : index
    %88 = vector.load %arg5[%c1_34, %c0_35, %c0_36] : memref<2x16x16xf32, #tpu.memory_space<vmem>>, vector<1x16x16xf32>
    %89 = vector.shape_cast %88 : vector<1x16x16xf32> to vector<16x16xf32>
    %cst_37 = arith.constant dense<0.000000e+00> : vector<8x16xf32>
    %90 = tpu.matmul %84, %89, %cst_37 {dimension_numbers = #tpu.dot_dimension_numbers<[1], [0], [0], [1], [0, 0, 1, 1], [], []>} : vector<8x16xf32>, vector<16x16xf32>, vector<8x16xf32> -> vector<8x16xf32>
    %91 = vector.shape_cast %87 : vector<64x16xf32> to vector<8x8x16xf32>
    %92 = vector.shape_cast %90 : vector<8x16xf32> to vector<8x1x16xf32>
    %93 = vector.broadcast %92 : vector<8x1x16xf32> to vector<8x8x16xf32>
    %94 = arith.addf %91, %93 : vector<8x8x16xf32>
    %95 = vector.extract_strided_slice %0 {offsets = [2, 0], sizes = [1, 16], strides = [1, 1]} : vector<9x16xf32> to vector<1x16xf32>
    %96 = vector.shape_cast %95 : vector<1x16xf32> to vector<1x1x16xf32>
    %97 = vector.broadcast %96 : vector<1x1x16xf32> to vector<8x8x16xf32>
    %98 = arith.addf %94, %97 : vector<8x8x16xf32>
    %99 = vector.extract_strided_slice %0 {offsets = [5, 0], sizes = [1, 16], strides = [1, 1]} : vector<9x16xf32> to vector<1x16xf32>
    %100 = vector.extract_strided_slice %0 {offsets = [8, 0], sizes = [1, 16], strides = [1, 1]} : vector<9x16xf32> to vector<1x16xf32>
    %cst_38 = arith.constant dense<0.000000e+00> : vector<8x8xf32>
    %101 = vector.multi_reduction <add>, %98, %cst_38 [2] : vector<8x8x16xf32> to vector<8x8xf32>
    %102 = vector.shape_cast %101 : vector<8x8xf32> to vector<8x8x1xf32>
    %cst_39 = arith.constant 1.600000e+01 : f32
    %103 = vector.broadcast %cst_39 : f32 to vector<8x8x1xf32>
    %104 = arith.divf %102, %103 : vector<8x8x1xf32>
    %105 = vector.broadcast %104 : vector<8x8x1xf32> to vector<8x8x16xf32>
    %106 = arith.subf %98, %105 : vector<8x8x16xf32>
    %107 = arith.mulf %106, %106 : vector<8x8x16xf32>
    %cst_40 = arith.constant dense<0.000000e+00> : vector<8x8xf32>
    %108 = vector.multi_reduction <add>, %107, %cst_40 [2] : vector<8x8x16xf32> to vector<8x8xf32>
    %109 = vector.shape_cast %108 : vector<8x8xf32> to vector<8x8x1xf32>
    %cst_41 = arith.constant 1.600000e+01 : f32
    %110 = vector.broadcast %cst_41 : f32 to vector<8x8x1xf32>
    %111 = arith.divf %109, %110 : vector<8x8x1xf32>
    %cst_42 = arith.constant 9.99999974E-6 : f32
    %112 = vector.broadcast %cst_42 : f32 to vector<8x8x1xf32>
    %113 = arith.addf %111, %112 : vector<8x8x1xf32>
    %114 = math.rsqrt %113 : vector<8x8x1xf32>
    %115 = vector.broadcast %114 : vector<8x8x1xf32> to vector<8x8x16xf32>
    %116 = arith.mulf %106, %115 : vector<8x8x16xf32>
    %117 = vector.shape_cast %99 : vector<1x16xf32> to vector<1x1x16xf32>
    %118 = vector.broadcast %117 : vector<1x1x16xf32> to vector<8x8x16xf32>
    %119 = arith.mulf %116, %118 : vector<8x8x16xf32>
    %120 = vector.shape_cast %100 : vector<1x16xf32> to vector<1x1x16xf32>
    %121 = vector.broadcast %120 : vector<1x1x16xf32> to vector<8x8x16xf32>
    %122 = arith.addf %119, %121 : vector<8x8x16xf32>
    %cst_43 = arith.constant 0.000000e+00 : f32
    %123 = vector.broadcast %cst_43 : f32 to vector<8x8x16xf32>
    %124 = arith.maximumf %122, %123 : vector<8x8x16xf32>
    %125 = arith.addf %124, %4 : vector<8x8x16xf32>
    %cst_44 = arith.constant dense<0xFF800000> : vector<8x16xf32>
    %126 = vector.multi_reduction <maximumf>, %125, %cst_44 [1] : vector<8x8x16xf32> to vector<8x16xf32>
    %cst_45 = arith.constant 0.000000e+00 : f32
    %127 = vector.broadcast %cst_45 : f32 to vector<8x16xf32>
    %128 = arith.maximumf %126, %127 : vector<8x16xf32>
    %cst_46 = arith.constant dense<0xFF800000> : vector<8x16xf32>
    %129 = vector.multi_reduction <maximumf>, %124, %cst_46 [1] : vector<8x8x16xf32> to vector<8x16xf32>
    %c0_47 = arith.constant 0 : index
    %c0_48 = arith.constant 0 : index
    %130 = vector.load %arg7[%c0_47, %c0_48] : memref<8x32xf32, #tpu.memory_space<vmem>>, vector<8x16xf32>
    tpu.vector_store %arg7[%c0_47, %c0_48], %129 {strides = array<i32>} : memref<8x32xf32, #tpu.memory_space<vmem>>, vector<8x16xf32>,
    %c0_49 = arith.constant 0 : index
    %c16 = arith.constant 16 : index
    %131 = vector.load %arg7[%c0_49, %c16] : memref<8x32xf32, #tpu.memory_space<vmem>>, vector<8x16xf32>
    tpu.vector_store %arg7[%c0_49, %c16], %128 {strides = array<i32>} : memref<8x32xf32, #tpu.memory_space<vmem>>, vector<8x16xf32>,
    return
  }
  func.func @transform_0(%arg0: i32) -> (i32, i32) {
    %c0_i32 = arith.constant 0 : i32
    %c0_i32_0 = arith.constant 0 : i32
    return %arg0, %c0_i32 : i32, i32
  }
  func.func @transform_1(%arg0: i32) -> (i32, i32) {
    %c0_i32 = arith.constant 0 : i32
    %c0_i32_0 = arith.constant 0 : i32
    return %arg0, %c0_i32 : i32, i32
  }
  func.func @transform_2(%arg0: i32) -> (i32, i32) {
    %c0_i32 = arith.constant 0 : i32
    %c0_i32_0 = arith.constant 0 : i32
    %c0_i32_1 = arith.constant 0 : i32
    return %c0_i32, %c0_i32_0 : i32, i32
  }
  func.func @transform_3(%arg0: i32) -> (i32, i32, i32) {
    %c0_i32 = arith.constant 0 : i32
    %c0_i32_0 = arith.constant 0 : i32
    %c0_i32_1 = arith.constant 0 : i32
    %c0_i32_2 = arith.constant 0 : i32
    return %c0_i32, %c0_i32_0, %c0_i32_1 : i32, i32, i32
  }
  func.func @transform_4(%arg0: i32) -> (i32, i32, i32) {
    %c0_i32 = arith.constant 0 : i32
    %c0_i32_0 = arith.constant 0 : i32
    %c0_i32_1 = arith.constant 0 : i32
    %c0_i32_2 = arith.constant 0 : i32
    return %c0_i32, %c0_i32_0, %c0_i32_1 : i32, i32, i32
  }
  func.func @transform_5(%arg0: i32) -> (i32, i32) {
    %c0_i32 = arith.constant 0 : i32
    %c0_i32_0 = arith.constant 0 : i32
    %c0_i32_1 = arith.constant 0 : i32
    return %c0_i32, %c0_i32_0 : i32, i32
  }
  func.func @transform_6(%arg0: i32) -> (i32, i32) {
    %c0_i32 = arith.constant 0 : i32
    %c0_i32_0 = arith.constant 0 : i32
    return %arg0, %c0_i32 : i32, i32
  }
}

</mosaic_0001>

<llo_original>
// kernel: tpu_custom_call.1
$region0: #{tpu_custom_call.1}
  #allocation0 [shape = 'u32[]', space=smem, size = 0x4, offset = 0x4, fixed_abs, tag = 'smem constant byte address 0x4 - core index']
  #allocation1 [shape = 'u32[72,128]{1,0:T(1,128)}', space=vmem, size = 0x9000, scoped, tag = 'internal scratch']
  %s0 = inlined_call_operand.vmem [shape: f32[128,32], index: 0, kind: input, shape index: {}]
  %s1 = inlined_call_operand.vmem [shape: f32[16,8], index: 1, kind: input, shape index: {}]
  %s2 = inlined_call_operand.vmem [shape: f32[32,16], index: 2, kind: input, shape index: {}]
  %s3 = inlined_call_operand.vmem [shape: f32[2,16,16], index: 3, kind: input, shape index: {}]
  %s4 = inlined_call_operand.vmem [shape: f32[2,16,16], index: 4, kind: input, shape index: {}]
  %s5 = inlined_call_operand.vmem [shape: f32[9,16], index: 5, kind: input, shape index: {}]
  %s6 = inlined_call_operand.hbm [shape: f32[16,32], index: 6, kind: output, shape index: {}]
  %s7 = sld [smem:[#allocation0]]
  $region57: #{tpu_custom_call.1} parent=0
    _
  %s9 = ssub.s32 1, %s7
  %s10 = scalar_select 0, %s9, %s7
  $region1: #{tpu_custom_call.1} parent=0
    #allocation2 [shape = 'u8[8192]{0}', space=vmem, size = 0x2000, scoped, tag = 'output window, operand 0']
    #allocation3 [shape = 's32[2]{0}', space=sflag, size = 0x8, scoped, tag = 'scoped memory for tpu_custom_call.1']
    %11 = vsyncpa [#allocation3], 0
    %s12 = scalar_lea.sflag [#allocation3], 1
    %13 = vsyncpa %s12, 0
    loop: start=0, step=1, limit=4
    $region2: #{tpu_custom_call.1} parent=1 // loop_pre_header
      _
    $region3: #{tpu_custom_call.1} parent=1 // loop_header
      %s15 = sphi 0, %s19
      %p16 = scmp.ge.s32.totalorder %s15, 4
      %s25 = sphi 0, %s27
      %s28 = sphi 0, %s25
      %s29 = sphi 0, %s28
      %s45 = sphi 0, %s29
      %s51 = sphi 0, %s53
      %s54 = sphi 0, %s51
      %s55 = sphi 0, %s54
      %s71 = sphi 0, %s55
      %s75 = sphi 0, %s75
      %s77 = sphi 0, %s75
      %s78 = sphi 0, %s77
      %s92 = sphi 0, %s78
      %s96 = sphi 0, %s96
      %s98 = sphi 0, %s96
      %s99 = sphi 0, %s98
      %s113 = sphi 0, %s99
      %s117 = sphi 0, %s117
      %s119 = sphi 0, %s117
      %s120 = sphi 0, %s119
      %s134 = sphi 0, %s120
      %s138 = sphi 0, %s138
      %s140 = sphi 0, %s138
      %s141 = sphi 0, %s140
      %s155 = sphi 0, %s141
      %s161 = sphi 0, %s163
      %s164 = sphi 0, %s161
      %s165 = sphi 0, %s164
      %s181 = sphi 0, %s165
    $region4: #{tpu_custom_call.1} parent=1 // loop_header_branch
      %18 = sbr.rel (%p16) target = $region8
    $region5: #{tpu_custom_call.1} parent=1 // loop_body
      %s20 = ssub.s32 %s15, 1
      %s21 = ssub.s32 %s15, 2
      %s22 = sadd.s32 %s15, 1
      %s23 = ssub.s32 %s15, %s22
      %p24 = scmp.eq.s32.totalorder %s23, 0
      %s26 = sadd.s32 %s25, 1
      %s27 = scalar_select %p24, %s25, %s26
      %p30 = pneg %p24
      %p31 = scmp.eq.s32.totalorder %s15, 1
      %p32 = por %p30, %p31
      %p33 = scmp.ne.s32.totalorder %s25, %s28
      %p34 = scmp.eq.s32.totalorder %s15, 0
      %p35 = por %p33, %p34
      %p36 = scmp.ne.s32.totalorder %s25, %s28
      %p37 = scmp.eq.s32.totalorder %s20, 1
      %p38 = por %p36, %p37
      %p39 = scmp.ne.s32.totalorder %s28, %s29
      %p40 = scmp.eq.s32.totalorder %s20, 0
      %p41 = por %p39, %p40
      %p42 = scmp.ne.s32.totalorder %s28, %s29
      %p43 = scmp.eq.s32.totalorder %s21, 1
      %p44 = por %p42, %p43
      %p46 = scmp.ne.s32.totalorder %s29, %s45
      %p47 = scmp.eq.s32.totalorder %s21, 0
      %p48 = por %p46, %p47
      %s49 = ssub.s32 %s15, %s22
      %p50 = scmp.eq.s32.totalorder %s49, 0
      %s52 = sadd.s32 %s51, 1
      %s53 = scalar_select %p50, %s51, %s52
      %p56 = pneg %p50
      %p57 = scmp.eq.s32.totalorder %s15, 1
      %p58 = por %p56, %p57
      %p59 = scmp.ne.s32.totalorder %s51, %s54
      %p60 = scmp.eq.s32.totalorder %s15, 0
      %p61 = por %p59, %p60
      %p62 = scmp.ne.s32.totalorder %s51, %s54
      %p63 = scmp.eq.s32.totalorder %s20, 1
      %p64 = por %p62, %p63
      %p65 = scmp.ne.s32.totalorder %s54, %s55
      %p66 = scmp.eq.s32.totalorder %s20, 0
      %p67 = por %p65, %p66
      %p68 = scmp.ne.s32.totalorder %s54, %s55
      %p69 = scmp.eq.s32.totalorder %s21, 1
      %p70 = por %p68, %p69
      %p72 = scmp.ne.s32.totalorder %s55, %s71
      %p73 = scmp.eq.s32.totalorder %s21, 0
      %p74 = por %p72, %p73
      %s76 = sadd.s32 %s75, 1
      %p79 = scmp.eq.s32.totalorder %s15, 1
      %p80 = scmp.ne.s32.totalorder %s75, %s77
      %p81 = scmp.eq.s32.totalorder %s15, 0
      %p82 = por %p80, %p81
      %p83 = scmp.ne.s32.totalorder %s75, %s77
      %p84 = scmp.eq.s32.totalorder %s20, 1
      %p85 = por %p83, %p84
      %p86 = scmp.ne.s32.totalorder %s77, %s78
      %p87 = scmp.eq.s32.totalorder %s20, 0
      %p88 = por %p86, %p87
      %p89 = scmp.ne.s32.totalorder %s77, %s78
      %p90 = scmp.eq.s32.totalorder %s21, 1
      %p91 = por %p89, %p90
      %p93 = scmp.ne.s32.totalorder %s78, %s92
      %p94 = scmp.eq.s32.totalorder %s21, 0
      %p95 = por %p93, %p94
      %s97 = sadd.s32 %s96, 1
      %p100 = scmp.eq.s32.totalorder %s15, 1
      %p101 = scmp.ne.s32.totalorder %s96, %s98
      %p102 = scmp.eq.s32.totalorder %s15, 0
      %p103 = por %p101, %p102
      %p104 = scmp.ne.s32.totalorder %s96, %s98
      %p105 = scmp.eq.s32.totalorder %s20, 1
      %p106 = por %p104, %p105
      %p107 = scmp.ne.s32.totalorder %s98, %s99
      %p108 = scmp.eq.s32.totalorder %s20, 0
      %p109 = por %p107, %p108
      %p110 = scmp.ne.s32.totalorder %s98, %s99
      %p111 = scmp.eq.s32.totalorder %s21, 1
      %p112 = por %p110, %p111
      %p114 = scmp.ne.s32.totalorder %s99, %s113
      %p115 = scmp.eq.s32.totalorder %s21, 0
      %p116 = por %p114, %p115
      %s118 = sadd.s32 %s117, 1
      %p121 = scmp.eq.s32.totalorder %s15, 1
      %p122 = scmp.ne.s32.totalorder %s117, %s119
      %p123 = scmp.eq.s32.totalorder %s15, 0
      %p124 = por %p122, %p123
      %p125 = scmp.ne.s32.totalorder %s117, %s119
      %p126 = scmp.eq.s32.totalorder %s20, 1
      %p127 = por %p125, %p126
      %p128 = scmp.ne.s32.totalorder %s119, %s120
      %p129 = scmp.eq.s32.totalorder %s20, 0
      %p130 = por %p128, %p129
      %p131 = scmp.ne.s32.totalorder %s119, %s120
      %p132 = scmp.eq.s32.totalorder %s21, 1
      %p133 = por %p131, %p132
      %p135 = scmp.ne.s32.totalorder %s120, %s134
      %p136 = scmp.eq.s32.totalorder %s21, 0
      %p137 = por %p135, %p136
      %s139 = sadd.s32 %s138, 1
      %p142 = scmp.eq.s32.totalorder %s15, 1
      %p143 = scmp.ne.s32.totalorder %s138, %s140
      %p144 = scmp.eq.s32.totalorder %s15, 0
      %p145 = por %p143, %p144
      %p146 = scmp.ne.s32.totalorder %s138, %s140
      %p147 = scmp.eq.s32.totalorder %s20, 1
      %p148 = por %p146, %p147
      %p149 = scmp.ne.s32.totalorder %s140, %s141
      %p150 = scmp.eq.s32.totalorder %s20, 0
      %p151 = por %p149, %p150
      %p152 = scmp.ne.s32.totalorder %s140, %s141
      %p153 = scmp.eq.s32.totalorder %s21, 1
      %p154 = por %p152, %p153
      %p156 = scmp.ne.s32.totalorder %s141, %s155
      %p157 = scmp.eq.s32.totalorder %s21, 0
      %p158 = por %p156, %p157
      %s159 = ssub.s32 %s15, %s22
      %p160 = scmp.eq.s32.totalorder %s159, 0
      %s162 = sadd.s32 %s161, 1
      %s163 = scalar_select %p160, %s161, %s162
      %p166 = pneg %p160
      %p167 = scmp.eq.s32.totalorder %s15, 1
      %p168 = por %p166, %p167
      %p169 = scmp.ne.s32.totalorder %s161, %s164
      %p170 = scmp.eq.s32.totalorder %s15, 0
      %p171 = por %p169, %p170
      %p172 = scmp.ne.s32.totalorder %s161, %s164
      %p173 = scmp.eq.s32.totalorder %s20, 1
      %p174 = por %p172, %p173
      %p175 = scmp.ne.s32.totalorder %s164, %s165
      %p176 = scmp.eq.s32.totalorder %s20, 0
      %p177 = por %p175, %p176
      %p178 = scmp.ne.s32.totalorder %s164, %s165
      %p179 = scmp.eq.s32.totalorder %s21, 1
      %p180 = por %p178, %p179
      %p182 = scmp.ne.s32.totalorder %s165, %s181
      %p183 = scmp.eq.s32.totalorder %s21, 0
      %p184 = por %p182, %p183
      %p185 = scmp.le.s32.totalorder 1, %s15
      %p186 = scmp.lt.s32.totalorder %s15, 3
      %p187 = pnand %p185, %p186
      %p188 = pneg %p187
      // Predicated region
      $region9: #{tpu_custom_call.1} parent=5 // pred_check
        _
      $region10: #{tpu_custom_call.1} parent=5 // pred_check_branch
        %190 = sbr.rel (%p187) target = $region12
      $region11: #{tpu_custom_call.1} parent=5 // pred_region
        %s191 = ssub.s32 %s15, 1
        // Predicated region
        $region13: #{tpu_custom_call.1} parent=11 // pred_check
          %p192 = pneg %p88
        $region14: #{tpu_custom_call.1} parent=11 // pred_check_branch
          %194 = sbr.rel (%p192) target = $region16
        $region15: #{tpu_custom_call.1} parent=11 // pred_region
          _
        $region16: #{tpu_custom_call.1} parent=11 // pred_fallthru
          _
        // Predicated region
        $region17: #{tpu_custom_call.1} parent=11 // pred_check
          %p195 = pneg %p109
        $region18: #{tpu_custom_call.1} parent=11 // pred_check_branch
          %197 = sbr.rel (%p195) target = $region20
        $region19: #{tpu_custom_call.1} parent=11 // pred_region
          _
        $region20: #{tpu_custom_call.1} parent=11 // pred_fallthru
          _
        // Predicated region
        $region21: #{tpu_custom_call.1} parent=11 // pred_check
          %p198 = pneg %p130
        $region22: #{tpu_custom_call.1} parent=11 // pred_check_branch
          %200 = sbr.rel (%p198) target = $region24
        $region23: #{tpu_custom_call.1} parent=11 // pred_region
          _
        $region24: #{tpu_custom_call.1} parent=11 // pred_fallthru
          _
        // Predicated region
        $region25: #{tpu_custom_call.1} parent=11 // pred_check
          %p201 = pneg %p151
        $region26: #{tpu_custom_call.1} parent=11 // pred_check_branch
          %203 = sbr.rel (%p201) target = $region28
        $region27: #{tpu_custom_call.1} parent=11 // pred_region
          _
        $region28: #{tpu_custom_call.1} parent=11 // pred_fallthru
          _
      $region12: #{tpu_custom_call.1} parent=5 // pred_fallthru
        _
      %p204 = scmp.lt.s32.totalorder %s15, 2
      // Predicated region
      $region29: #{tpu_custom_call.1} parent=5 // pred_check
        %p205 = pneg %p204
      $region30: #{tpu_custom_call.1} parent=5 // pred_check_branch
        %207 = sbr.rel (%p205) target = $region32
      $region31: #{tpu_custom_call.1} parent=5 // pred_region
        // Predicated region
        $region33: #{tpu_custom_call.1} parent=31 // pred_check
          %p208 = pneg %p35
        $region34: #{tpu_custom_call.1} parent=31 // pred_check_branch
          %210 = sbr.rel (%p208) target = $region36
        $region35: #{tpu_custom_call.1} parent=31 // pred_region
          %s211 = smul.u32 8, %s15
          %p212 = scmp.lt.s32.totalorder %s211, 15
          %s213 = scalar_select %p212, %s211, 15
          %s214 = smul.addr %s213, 8
          %s215 = scalar_lea.vmem %s0, %s214
          %s216 = smul.u32 8, %s15
        $region36: #{tpu_custom_call.1} parent=31 // pred_fallthru
          _
        // Predicated region
        $region37: #{tpu_custom_call.1} parent=31 // pred_check
          %p217 = pneg %p61
        $region38: #{tpu_custom_call.1} parent=31 // pred_check_branch
          %219 = sbr.rel (%p217) target = $region40
        $region39: #{tpu_custom_call.1} parent=31 // pred_region
          %p220 = scmp.lt.s32.totalorder %s15, 1
          %s221 = scalar_select %p220, %s15, 1
          %s222 = smul.addr %s221, 8
          %s223 = scalar_lea.vmem %s1, %s222
        $region40: #{tpu_custom_call.1} parent=31 // pred_fallthru
          _
      $region32: #{tpu_custom_call.1} parent=5 // pred_fallthru
        _
      %p224 = scmp.le.s32.totalorder 1, %s15
      %p225 = scmp.lt.s32.totalorder %s15, 3
      %p226 = pnand %p224, %p225
      %p227 = pneg %p226
      // Predicated region
      $region41: #{tpu_custom_call.1} parent=5 // pred_check
        _
      $region42: #{tpu_custom_call.1} parent=5 // pred_check_branch
        %229 = sbr.rel (%p226) target = $region44
      $region43: #{tpu_custom_call.1} parent=5 // pred_region
        %s230 = ssub.s32 %s15, 1
        %s231 = smul.u32 8, %s20
        %p232 = scmp.lt.s32.totalorder %s231, 15
        %s233 = scalar_select %p232, %s231, 15
        %s234 = smul.addr %s233, 8
        %s235 = scalar_lea.vmem %s0, %s234
        %p236 = pneg %p41
        %p237 = pneg %p38
        %p238 = scmp.lt.s32.totalorder %s20, 1
        %s239 = scalar_select %p238, %s20, 1
        %s240 = smul.addr %s239, 8
        %s241 = scalar_lea.vmem %s1, %s240
        %p242 = pneg %p67
        %p243 = pneg %p64
        %p244 = pneg %p88
        %p245 = pneg %p85
        %p246 = pneg %p109
        %p247 = pneg %p106
        %p248 = pneg %p130
        %p249 = pneg %p127
        %p250 = pneg %p151
        %p251 = pneg %p148
        %p252 = pneg %p177
        %p253 = pneg %p174
        %s254 = sand.u32 %s164, 1
        %s255 = scalar_lea.sflag [#allocation3], %s254
        %s256 = sand.u32 %s164, 1
        %s257 = smul.addr %s256, 8
        %s258 = scalar_lea.vmem [#allocation2], %s257
        %s259 = smul.u32 8, %s20
        %p260 = scmp.lt.s32.totalorder %s259, 15
        %s261 = scalar_select %p260, %s259, 15
        %s262 = smul.addr %s261, 8
        %s263 = scalar_lea.vmem %s0, %s262
        %s264 = smul.u32 8, %s20
        %p265 = scmp.lt.s32.totalorder %s20, 1
        %s266 = scalar_select %p265, %s20, 1
        %s267 = smul.addr %s266, 8
        %s268 = scalar_lea.vmem %s1, %s267
        %v269 = vld [vmem:[%s5] sm:$0xff]
        %v270 = vld [vmem:[%s5 + $0x8] sm:$0x1]
        %v271 = vld [vmem:[%s268] sm:$0xff]
        %v272 = vperm.slane %v271, 0
        %v273 = vlaneseq
        %v274 = vshrl.u32 %v273, 7
        %276 = vset.pattern.permute.xlu0 %v274
        %277 = vperm.xlu0 %276, %v272
        %v278 = vpop.permute.xlu0 %277
        %v279 = vperm.slane %v271, 1
        %v280 = vlaneseq
        %v281 = vshrl.u32 %v280, 7
        %283 = vset.pattern.permute.xlu0 %v281
        %284 = vperm.xlu0 %283, %v279
        %v285 = vpop.permute.xlu0 %284
        %v286 = vperm.slane %v271, 2
        %v287 = vlaneseq
        %v288 = vshrl.u32 %v287, 7
        %290 = vset.pattern.permute.xlu0 %v288
        %291 = vperm.xlu0 %290, %v286
        %v292 = vpop.permute.xlu0 %291
        %v293 = vperm.slane %v271, 3
        %v294 = vlaneseq
        %v295 = vshrl.u32 %v294, 7
        %297 = vset.pattern.permute.xlu0 %v295
        %298 = vperm.xlu0 %297, %v293
        %v299 = vpop.permute.xlu0 %298
        %v300 = vperm.slane %v271, 4
        %v301 = vlaneseq
        %v302 = vshrl.u32 %v301, 7
        %304 = vset.pattern.permute.xlu0 %v302
        %305 = vperm.xlu0 %304, %v300
        %v306 = vpop.permute.xlu0 %305
        %v307 = vperm.slane %v271, 5
        %v308 = vlaneseq
        %v309 = vshrl.u32 %v308, 7
        %311 = vset.pattern.permute.xlu0 %v309
        %312 = vperm.xlu0 %311, %v307
        %v313 = vpop.permute.xlu0 %312
        %v314 = vperm.slane %v271, 6
        %v315 = vlaneseq
        %v316 = vshrl.u32 %v315, 7
        %318 = vset.pattern.permute.xlu0 %v316
        %319 = vperm.xlu0 %318, %v314
        %v320 = vpop.permute.xlu0 %319
        %v321 = vperm.slane %v271, 7
        %v322 = vlaneseq
        %v323 = vshrl.u32 %v322, 7
        %325 = vset.pattern.permute.xlu0 %v323
        %326 = vperm.xlu0 %325, %v321
        %v327 = vpop.permute.xlu0 %326
        %v328 = vld [vmem:[%s263] sm:$0xff]
        %v329 = vld [vmem:[%s263 + $0x8] sm:$0xff]
        %v330 = vld [vmem:[%s263 + $0x10] sm:$0xff]
        %v331 = vld [vmem:[%s263 + $0x18] sm:$0xff]
        %v332 = vld [vmem:[%s263 + $0x20] sm:$0xff]
        %v333 = vld [vmem:[%s263 + $0x28] sm:$0xff]
        %v334 = vld [vmem:[%s263 + $0x30] sm:$0xff]
        %v335 = vld [vmem:[%s263 + $0x38] sm:$0xff]
        %v336 = vld [vmem:[%s2] sm:$0xff]
        %v337 = vld [vmem:[%s2 + $0x8] sm:$0xff]
        %v338 = vld [vmem:[%s2 + $0x10] sm:$0xff]
        %v339 = vld [vmem:[%s2 + $0x18] sm:$0xff]
        %v340 = vperm.slane %v269, 0
        %vm341 = vcmask 261120
        %v343 = vsel %vm341, %v328, 0
        %v346 = vsel %vm341, %v329, 0
        %v349 = vsel %vm341, %v330, 0
        %v352 = vsel %vm341, %v331, 0
        %v355 = vsel %vm341, %v332, 0
        %v358 = vsel %vm341, %v333, 0
        %v361 = vsel %vm341, %v334, 0
        %v364 = vsel %vm341, %v335, 0
        %366 = vmatpush.msra.mxu0 0.0
        %367 = vmatpush.msra.mxu0 0.0
        %368 = vmatpush.msra.mxu0 0.0
        %369 = vmatpush.msra.mxu0 0.0
        %370 = vmatpush.msra.mxu0 0.0
        %371 = vmatpush.msra.mxu0 0.0
        %372 = vmatpush.msra.mxu0 0.0
        %373 = vmatpush.msra.mxu0 0.0
        %374 = vmatpush.msra.mxu0 0.0
        %375 = vmatpush.msra.mxu0 0.0
        %376 = vmatpush.msra.mxu0 0.0
        %377 = vmatpush.msra.mxu0 0.0
        %378 = vmatpush.msra.mxu0 %v339
        %379 = vmatpush.msra.mxu0 %v338
        %380 = vmatpush.msra.mxu0 %v337
        %381 = vmatpush.msra.mxu0 %v336
        %382 = vmatmul.f32.gmra.mxu0 %v343
        %v383 = vpop.f32.mrf.mxu0
        %v384 = vadd.f32 %v340, %v383
        %385 = vmatmul.f32.gmra.mxu0 %v346
        %v386 = vpop.f32.mrf.mxu0
        %v387 = vadd.f32 %v340, %v386
        %388 = vmatmul.f32.gmra.mxu0 %v349
        %v389 = vpop.f32.mrf.mxu0
        %v390 = vadd.f32 %v340, %v389
        %391 = vmatmul.f32.gmra.mxu0 %v352
        %v392 = vpop.f32.mrf.mxu0
        %v393 = vadd.f32 %v340, %v392
        %394 = vmatmul.f32.gmra.mxu0 %v355
        %v395 = vpop.f32.mrf.mxu0
        %v396 = vadd.f32 %v340, %v395
        %397 = vmatmul.f32.gmra.mxu0 %v358
        %v398 = vpop.f32.mrf.mxu0
        %v399 = vadd.f32 %v340, %v398
        %400 = vmatmul.f32.gmra.mxu0 %v361
        %v401 = vpop.f32.mrf.mxu0
        %v402 = vadd.f32 %v340, %v401
        %403 = vmatmul.f32.gmra.mxu0 %v364
        %v404 = vpop.f32.mrf.mxu0
        %v405 = vadd.f32 %v340, %v404
        %406 = vdwg.mxu0
        %vm407 = vcmask 130048
        %v408 = vsel %vm407, %v384, 0.0
        %409 = vadd.xlane.f32.xlu0 %v408
        %v410 = vpop.xlane.xlu0 %409
        %v411 = vsel %vm407, %v387, 0.0
        %412 = vadd.xlane.f32.xlu0 %v411
        %v413 = vpop.xlane.xlu0 %412
        %v414 = vsel %vm407, %v390, 0.0
        %415 = vadd.xlane.f32.xlu0 %v414
        %v416 = vpop.xlane.xlu0 %415
        %v417 = vsel %vm407, %v393, 0.0
        %418 = vadd.xlane.f32.xlu0 %v417
        %v419 = vpop.xlane.xlu0 %418
        %v420 = vsel %vm407, %v396, 0.0
        %421 = vadd.xlane.f32.xlu0 %v420
        %v422 = vpop.xlane.xlu0 %421
        %v423 = vsel %vm407, %v399, 0.0
        %424 = vadd.xlane.f32.xlu0 %v423
        %v425 = vpop.xlane.xlu0 %424
        %v426 = vsel %vm407, %v402, 0.0
        %427 = vadd.xlane.f32.xlu0 %v426
        %v428 = vpop.xlane.xlu0 %427
        %v429 = vsel %vm407, %v405, 0.0
        %430 = vadd.xlane.f32.xlu0 %v429
        %v431 = vpop.xlane.xlu0 %430
        %v432 = vrcp.pop 16.0
        %v433 = vmul.f32 16.0, %v432
        %v434 = vsub.f32 1.0, %v433
        %v435 = vmul.f32 %v432, %v434
        %v436 = vadd.f32 %v432, %v435
        %vm437 = vweird.f32 %v432
        %v438 = vsel %vm437, %v432, %v436
        %v439 = vmul.f32 %v410, %v438
        %v440 = vmul.f32 %v413, %v438
        %v441 = vmul.f32 %v416, %v438
        %v442 = vmul.f32 %v419, %v438
        %v443 = vmul.f32 %v422, %v438
        %v444 = vmul.f32 %v425, %v438
        %v445 = vmul.f32 %v428, %v438
        %v446 = vmul.f32 %v431, %v438
        %v447 = vsub.f32 %v384, %v439
        %v448 = vsub.f32 %v387, %v440
        %v449 = vsub.f32 %v390, %v441
        %v450 = vsub.f32 %v393, %v442
        %v451 = vsub.f32 %v396, %v443
        %v452 = vsub.f32 %v399, %v444
        %v453 = vsub.f32 %v402, %v445
        %v454 = vsub.f32 %v405, %v446
        %v455 = vmul.f32 %v447, %v447
        %v456 = vmul.f32 %v448, %v448
        %v457 = vmul.f32 %v449, %v449
        %v458 = vmul.f32 %v450, %v450
        %v459 = vmul.f32 %v451, %v451
        %v460 = vmul.f32 %v452, %v452
        %v461 = vmul.f32 %v453, %v453
        %v462 = vmul.f32 %v454, %v454
        %v463 = vsel %vm407, %v455, 0.0
        %464 = vadd.xlane.f32.xlu0 %v463
        %v465 = vpop.xlane.xlu0 %464
        %v466 = vsel %vm407, %v456, 0.0
        %467 = vadd.xlane.f32.xlu0 %v466
        %v468 = vpop.xlane.xlu0 %467
        %v469 = vsel %vm407, %v457, 0.0
        %470 = vadd.xlane.f32.xlu0 %v469
        %v471 = vpop.xlane.xlu0 %470
        %v472 = vsel %vm407, %v458, 0.0
        %473 = vadd.xlane.f32.xlu0 %v472
        %v474 = vpop.xlane.xlu0 %473
        %v475 = vsel %vm407, %v459, 0.0
        %476 = vadd.xlane.f32.xlu0 %v475
        %v477 = vpop.xlane.xlu0 %476
        %v478 = vsel %vm407, %v460, 0.0
        %479 = vadd.xlane.f32.xlu0 %v478
        %v480 = vpop.xlane.xlu0 %479
        %v481 = vsel %vm407, %v461, 0.0
        %482 = vadd.xlane.f32.xlu0 %v481
        %v483 = vpop.xlane.xlu0 %482
        %v484 = vsel %vm407, %v462, 0.0
        %485 = vadd.xlane.f32.xlu0 %v484
        %v486 = vpop.xlane.xlu0 %485
        %v487 = vmul.f32 %v465, %v438
        %v488 = vmul.f32 %v468, %v438
        %v489 = vmul.f32 %v471, %v438
        %v490 = vmul.f32 %v474, %v438
        %v491 = vmul.f32 %v477, %v438
        %v492 = vmul.f32 %v480, %v438
        %v493 = vmul.f32 %v483, %v438
        %v494 = vmul.f32 %v486, %v438
        %v495 = vadd.f32 %v487, 1e-05
        %v496 = vadd.f32 %v488, 1e-05
        %v497 = vadd.f32 %v489, 1e-05
        %v498 = vadd.f32 %v490, 1e-05
        %v499 = vadd.f32 %v491, 1e-05
        %v500 = vadd.f32 %v492, 1e-05
        %v501 = vadd.f32 %v493, 1e-05
        %v502 = vadd.f32 %v494, 1e-05
        %v503 = vrsqrt.pop %v495
        %v504 = vmul.f32 %v503, %v495
        %v505 = vmul.f32 %v504, %v503
        %v506 = vmul.f32 0.5, %v505
        %v507 = vsub.f32 1.5, %v506
        %v508 = vmul.f32 %v503, %v507
        %vm509 = vweird.f32 %v495
        %vm510 = vweird.f32 %v503
        %vm511 = vmor %vm509, %vm510
        %v512 = vsel %vm511, %v503, %v508
        %v513 = vrsqrt.pop %v496
        %v514 = vmul.f32 %v513, %v496
        %v515 = vmul.f32 %v514, %v513
        %v516 = vmul.f32 0.5, %v515
        %v517 = vsub.f32 1.5, %v516
        %v518 = vmul.f32 %v513, %v517
        %vm519 = vweird.f32 %v496
        %vm520 = vweird.f32 %v513
        %vm521 = vmor %vm519, %vm520
        %v522 = vsel %vm521, %v513, %v518
        %v523 = vrsqrt.pop %v497
        %v524 = vmul.f32 %v523, %v497
        %v525 = vmul.f32 %v524, %v523
        %v526 = vmul.f32 0.5, %v525
        %v527 = vsub.f32 1.5, %v526
        %v528 = vmul.f32 %v523, %v527
        %vm529 = vweird.f32 %v497
        %vm530 = vweird.f32 %v523
        %vm531 = vmor %vm529, %vm530
        %v532 = vsel %vm531, %v523, %v528
        %v533 = vrsqrt.pop %v498
        %v534 = vmul.f32 %v533, %v498
        %v535 = vmul.f32 %v534, %v533
        %v536 = vmul.f32 0.5, %v535
        %v537 = vsub.f32 1.5, %v536
        %v538 = vmul.f32 %v533, %v537
        %vm539 = vweird.f32 %v498
        %vm540 = vweird.f32 %v533
        %vm541 = vmor %vm539, %vm540
        %v542 = vsel %vm541, %v533, %v538
        %v543 = vrsqrt.pop %v499
        %v544 = vmul.f32 %v543, %v499
        %v545 = vmul.f32 %v544, %v543
        %v546 = vmul.f32 0.5, %v545
        %v547 = vsub.f32 1.5, %v546
        %v548 = vmul.f32 %v543, %v547
        %vm549 = vweird.f32 %v499
        %vm550 = vweird.f32 %v543
        %vm551 = vmor %vm549, %vm550
        %v552 = vsel %vm551, %v543, %v548
        %v553 = vrsqrt.pop %v500
        %v554 = vmul.f32 %v553, %v500
        %v555 = vmul.f32 %v554, %v553
        %v556 = vmul.f32 0.5, %v555
        %v557 = vsub.f32 1.5, %v556
        %v558 = vmul.f32 %v553, %v557
        %vm559 = vweird.f32 %v500
        %vm560 = vweird.f32 %v553
        %vm561 = vmor %vm559, %vm560
        %v562 = vsel %vm561, %v553, %v558
        %v563 = vrsqrt.pop %v501
        %v564 = vmul.f32 %v563, %v501
        %v565 = vmul.f32 %v564, %v563
        %v566 = vmul.f32 0.5, %v565
        %v567 = vsub.f32 1.5, %v566
        %v568 = vmul.f32 %v563, %v567
        %vm569 = vweird.f32 %v501
        %vm570 = vweird.f32 %v563
        %vm571 = vmor %vm569, %vm570
        %v572 = vsel %vm571, %v563, %v568
        %v573 = vrsqrt.pop %v502
        %v574 = vmul.f32 %v573, %v502
        %v575 = vmul.f32 %v574, %v573
        %v576 = vmul.f32 0.5, %v575
        %v577 = vsub.f32 1.5, %v576
        %v578 = vmul.f32 %v573, %v577
        %vm579 = vweird.f32 %v502
        %vm580 = vweird.f32 %v573
        %vm581 = vmor %vm579, %vm580
        %v582 = vsel %vm581, %v573, %v578
        %v583 = vmul.f32 %v447, %v512
        %v584 = vmul.f32 %v448, %v522
        %v585 = vmul.f32 %v449, %v532
        %v586 = vmul.f32 %v450, %v542
        %v587 = vmul.f32 %v451, %v552
        %v588 = vmul.f32 %v452, %v562
        %v589 = vmul.f32 %v453, %v572
        %v590 = vmul.f32 %v454, %v582
        %v591 = vperm.slane %v269, 3
        %v592 = vmul.f32 %v583, %v591
        %v593 = vmul.f32 %v584, %v591
        %v594 = vmul.f32 %v585, %v591
        %v595 = vmul.f32 %v586, %v591
        %v596 = vmul.f32 %v587, %v591
        %v597 = vmul.f32 %v588, %v591
        %v598 = vmul.f32 %v589, %v591
        %v599 = vmul.f32 %v590, %v591
        %v600 = vperm.slane %v269, 6
        %v601 = vadd.f32 %v592, %v600
        %v602 = vadd.f32 %v593, %v600
        %v603 = vadd.f32 %v594, %v600
        %v604 = vadd.f32 %v595, %v600
        %v605 = vadd.f32 %v596, %v600
        %v606 = vadd.f32 %v597, %v600
        %v607 = vadd.f32 %v598, %v600
        %v608 = vadd.f32 %v599, %v600
        %v609 = vmax.f32 %v601, 0.0
        %v610 = vmax.f32 %v602, 0.0
        %v611 = vmax.f32 %v603, 0.0
        %v612 = vmax.f32 %v604, 0.0
        %v613 = vmax.f32 %v605, 0.0
        %v614 = vmax.f32 %v606, 0.0
        %v615 = vmax.f32 %v607, 0.0
        %v616 = vmax.f32 %v608, 0.0
        %v617 = vadd.f32 %v609, %v278
        %v618 = vadd.f32 %v610, %v285
        %v619 = vadd.f32 %v611, %v292
        %v620 = vadd.f32 %v612, %v299
        %v621 = vadd.f32 %v613, %v306
        %v622 = vadd.f32 %v614, %v313
        %v623 = vadd.f32 %v615, %v320
        %v624 = vadd.f32 %v616, %v327
        %v625 = vsel %vm407, %v617, -inf
        %v626 = vrot.slane %v625, 4
        %v627 = vmax.f32 %v625, %v626
        %v628 = vrot.slane %v627, 2
        %v629 = vmax.f32 %v627, %v628
        %v630 = vrot.slane %v629, 1
        %v631 = vmax.f32 %v629, %v630
        %v632 = vsel %vm407, %v618, -inf
        %v633 = vrot.slane %v632, 4
        %v634 = vmax.f32 %v632, %v633
        %v635 = vrot.slane %v634, 2
        %v636 = vmax.f32 %v634, %v635
        %v637 = vrot.slane %v636, 1
        %v638 = vmax.f32 %v636, %v637
        %v639 = vsel %vm407, %v619, -inf
        %v640 = vrot.slane %v639, 4
        %v641 = vmax.f32 %v639, %v640
        %v642 = vrot.slane %v641, 2
        %v643 = vmax.f32 %v641, %v642
        %v644 = vrot.slane %v643, 1
        %v645 = vmax.f32 %v643, %v644
        %v646 = vsel %vm407, %v620, -inf
        %v647 = vrot.slane %v646, 4
        %v648 = vmax.f32 %v646, %v647
        %v649 = vrot.slane %v648, 2
        %v650 = vmax.f32 %v648, %v649
        %v651 = vrot.slane %v650, 1
        %v652 = vmax.f32 %v650, %v651
        %v653 = vsel %vm407, %v621, -inf
        %v654 = vrot.slane %v653, 4
        %v655 = vmax.f32 %v653, %v654
        %v656 = vrot.slane %v655, 2
        %v657 = vmax.f32 %v655, %v656
        %v658 = vrot.slane %v657, 1
        %v659 = vmax.f32 %v657, %v658
        %v660 = vsel %vm407, %v622, -inf
        %v661 = vrot.slane %v660, 4
        %v662 = vmax.f32 %v660, %v661
        %v663 = vrot.slane %v662, 2
        %v664 = vmax.f32 %v662, %v663
        %v665 = vrot.slane %v664, 1
        %v666 = vmax.f32 %v664, %v665
        %v667 = vsel %vm407, %v623, -inf
        %v668 = vrot.slane %v667, 4
        %v669 = vmax.f32 %v667, %v668
        %v670 = vrot.slane %v669, 2
        %v671 = vmax.f32 %v669, %v670
        %v672 = vrot.slane %v671, 1
        %v673 = vmax.f32 %v671, %v672
        %v674 = vsel %vm407, %v624, -inf
        %v675 = vrot.slane %v674, 4
        %v676 = vmax.f32 %v674, %v675
        %v677 = vrot.slane %v676, 2
        %v678 = vmax.f32 %v676, %v677
        %v679 = vrot.slane %v678, 1
        %v680 = vmax.f32 %v678, %v679
        %v681 = vmax.f32 %v631, 0.0
        %v682 = vmax.f32 %v638, 0.0
        %v683 = vmax.f32 %v645, 0.0
        %v684 = vmax.f32 %v652, 0.0
        %v685 = vmax.f32 %v659, 0.0
        %v686 = vmax.f32 %v666, 0.0
        %v687 = vmax.f32 %v673, 0.0
        %v688 = vmax.f32 %v680, 0.0
        %v689 = vld [vmem:[%s3] sm:$0xff]
        %v690 = vld [vmem:[%s3 + $0x8] sm:$0xff]
        %v692 = vsel %vm407, %v609, 0
        %v695 = vsel %vm407, %v610, 0
        %v698 = vsel %vm407, %v611, 0
        %v701 = vsel %vm407, %v612, 0
        %v704 = vsel %vm407, %v613, 0
        %v707 = vsel %vm407, %v614, 0
        %v710 = vsel %vm407, %v615, 0
        %v713 = vsel %vm407, %v616, 0
        %715 = vmatpush.msra.mxu0 0.0
        %716 = vmatpush.msra.mxu0 0.0
        %717 = vmatpush.msra.mxu0 0.0
        %718 = vmatpush.msra.mxu0 0.0
        %719 = vmatpush.msra.mxu0 0.0
        %720 = vmatpush.msra.mxu0 0.0
        %721 = vmatpush.msra.mxu0 0.0
        %722 = vmatpush.msra.mxu0 0.0
        %723 = vmatpush.msra.mxu0 0.0
        %724 = vmatpush.msra.mxu0 0.0
        %725 = vmatpush.msra.mxu0 0.0
        %726 = vmatpush.msra.mxu0 0.0
        %727 = vmatpush.msra.mxu0 0.0
        %728 = vmatpush.msra.mxu0 0.0
        %729 = vmatpush.msra.mxu0 %v690
        %730 = vmatpush.msra.mxu0 %v689
        %731 = vmatmul.f32.gmra.mxu0 %v692
        %v732 = vpop.f32.mrf.mxu0
        %v733 = vadd.f32 0.0, %v732
        %734 = vmatmul.f32.gmra.mxu0 %v695
        %v735 = vpop.f32.mrf.mxu0
        %v736 = vadd.f32 0.0, %v735
        %737 = vmatmul.f32.gmra.mxu0 %v698
        %v738 = vpop.f32.mrf.mxu0
        %v739 = vadd.f32 0.0, %v738
        %740 = vmatmul.f32.gmra.mxu0 %v701
        %v741 = vpop.f32.mrf.mxu0
        %v742 = vadd.f32 0.0, %v741
        %743 = vmatmul.f32.gmra.mxu0 %v704
        %v744 = vpop.f32.mrf.mxu0
        %v745 = vadd.f32 0.0, %v744
        %746 = vmatmul.f32.gmra.mxu0 %v707
        %v747 = vpop.f32.mrf.mxu0
        %v748 = vadd.f32 0.0, %v747
        %749 = vmatmul.f32.gmra.mxu0 %v710
        %v750 = vpop.f32.mrf.mxu0
        %v751 = vadd.f32 0.0, %v750
        %752 = vmatmul.f32.gmra.mxu0 %v713
        %v753 = vpop.f32.mrf.mxu0
        %v754 = vadd.f32 0.0, %v753
        %755 = vdwg.mxu0
        %v756 = vld [vmem:[%s4] sm:$0xff]
        %v757 = vld [vmem:[%s4 + $0x8] sm:$0xff]
        %vm766 = vcmask 1041409
        %v767 = vsel %vm766, %v682, %v681
        %vm768 = vcmask 1042434
        %v769 = vsel %vm768, %v683, %v767
        %vm770 = vcmask 1043459
        %v771 = vsel %vm770, %v684, %v769
        %vm772 = vcmask 1044484
        %v773 = vsel %vm772, %v685, %v771
        %vm774 = vcmask 1045509
        %v775 = vsel %vm774, %v686, %v773
        %vm776 = vcmask 1046534
        %v777 = vsel %vm776, %v687, %v775
        %vm778 = vcmask 1047559
        %v779 = vsel %vm778, %v688, %v777
        %v780 = vsel %vm407, %v779, 0
        %782 = vmatpush.msra.mxu0 0.0
        %783 = vmatpush.msra.mxu0 0.0
        %784 = vmatpush.msra.mxu0 0.0
        %785 = vmatpush.msra.mxu0 0.0
        %786 = vmatpush.msra.mxu0 0.0
        %787 = vmatpush.msra.mxu0 0.0
        %788 = vmatpush.msra.mxu0 0.0
        %789 = vmatpush.msra.mxu0 0.0
        %790 = vmatpush.msra.mxu0 0.0
        %791 = vmatpush.msra.mxu0 0.0
        %792 = vmatpush.msra.mxu0 0.0
        %793 = vmatpush.msra.mxu0 0.0
        %794 = vmatpush.msra.mxu0 0.0
        %795 = vmatpush.msra.mxu0 0.0
        %796 = vmatpush.msra.mxu0 %v757
        %797 = vmatpush.msra.mxu0 %v756
        %798 = vmatmul.f32.gmra.mxu0 %v780
        %v799 = vpop.f32.mrf.mxu0
        %v800 = vadd.f32 0.0, %v799
        %801 = vdwg.mxu0
        %v803 = vrot.slane %v800, 1
        %v804 = vrot.slane %v800, 2
        %v805 = vrot.slane %v800, 3
        %v806 = vrot.slane %v800, 4
        %v807 = vrot.slane %v800, 5
        %v808 = vrot.slane %v800, 6
        %v809 = vrot.slane %v800, 7
        %v810 = vperm.slane %v800, 0
        %v811 = vperm.slane %v803, 0
        %v812 = vperm.slane %v804, 0
        %v813 = vperm.slane %v805, 0
        %v814 = vperm.slane %v806, 0
        %v815 = vperm.slane %v807, 0
        %v816 = vperm.slane %v808, 0
        %v817 = vperm.slane %v809, 0
        %v826 = vadd.f32 %v733, %v810
        %v827 = vadd.f32 %v736, %v811
        %v828 = vadd.f32 %v739, %v812
        %v829 = vadd.f32 %v742, %v813
        %v830 = vadd.f32 %v745, %v814
        %v831 = vadd.f32 %v748, %v815
        %v832 = vadd.f32 %v751, %v816
        %v833 = vadd.f32 %v754, %v817
        %v834 = vperm.slane %v269, 1
        %v835 = vadd.f32 %v826, %v834
        %v836 = vadd.f32 %v827, %v834
        %v837 = vadd.f32 %v828, %v834
        %v838 = vadd.f32 %v829, %v834
        %v839 = vadd.f32 %v830, %v834
        %v840 = vadd.f32 %v831, %v834
        %v841 = vadd.f32 %v832, %v834
        %v842 = vadd.f32 %v833, %v834
        %v843 = vsel %vm407, %v835, 0.0
        %844 = vadd.xlane.f32.xlu0 %v843
        %v845 = vpop.xlane.xlu0 %844
        %v846 = vsel %vm407, %v836, 0.0
        %847 = vadd.xlane.f32.xlu0 %v846
        %v848 = vpop.xlane.xlu0 %847
        %v849 = vsel %vm407, %v837, 0.0
        %850 = vadd.xlane.f32.xlu0 %v849
        %v851 = vpop.xlane.xlu0 %850
        %v852 = vsel %vm407, %v838, 0.0
        %853 = vadd.xlane.f32.xlu0 %v852
        %v854 = vpop.xlane.xlu0 %853
        %v855 = vsel %vm407, %v839, 0.0
        %856 = vadd.xlane.f32.xlu0 %v855
        %v857 = vpop.xlane.xlu0 %856
        %v858 = vsel %vm407, %v840, 0.0
        %859 = vadd.xlane.f32.xlu0 %v858
        %v860 = vpop.xlane.xlu0 %859
        %v861 = vsel %vm407, %v841, 0.0
        %862 = vadd.xlane.f32.xlu0 %v861
        %v863 = vpop.xlane.xlu0 %862
        %v864 = vsel %vm407, %v842, 0.0
        %865 = vadd.xlane.f32.xlu0 %v864
        %v866 = vpop.xlane.xlu0 %865
        %v867 = vmul.f32 %v845, %v438
        %v868 = vmul.f32 %v848, %v438
        %v869 = vmul.f32 %v851, %v438
        %v870 = vmul.f32 %v854, %v438
        %v871 = vmul.f32 %v857, %v438
        %v872 = vmul.f32 %v860, %v438
        %v873 = vmul.f32 %v863, %v438
        %v874 = vmul.f32 %v866, %v438
        %v875 = vsub.f32 %v835, %v867
        %v876 = vsub.f32 %v836, %v868
        %v877 = vsub.f32 %v837, %v869
        %v878 = vsub.f32 %v838, %v870
        %v879 = vsub.f32 %v839, %v871
        %v880 = vsub.f32 %v840, %v872
        %v881 = vsub.f32 %v841, %v873
        %v882 = vsub.f32 %v842, %v874
        %v883 = vmul.f32 %v875, %v875
        %v884 = vmul.f32 %v876, %v876
        %v885 = vmul.f32 %v877, %v877
        %v886 = vmul.f32 %v878, %v878
        %v887 = vmul.f32 %v879, %v879
        %v888 = vmul.f32 %v880, %v880
        %v889 = vmul.f32 %v881, %v881
        %v890 = vmul.f32 %v882, %v882
        %v891 = vsel %vm407, %v883, 0.0
        %892 = vadd.xlane.f32.xlu0 %v891
        %v893 = vpop.xlane.xlu0 %892
        %v894 = vsel %vm407, %v884, 0.0
        %895 = vadd.xlane.f32.xlu0 %v894
        %v896 = vpop.xlane.xlu0 %895
        %v897 = vsel %vm407, %v885, 0.0
        %898 = vadd.xlane.f32.xlu0 %v897
        %v899 = vpop.xlane.xlu0 %898
        %v900 = vsel %vm407, %v886, 0.0
        %901 = vadd.xlane.f32.xlu0 %v900
        %v902 = vpop.xlane.xlu0 %901
        %v903 = vsel %vm407, %v887, 0.0
        %904 = vadd.xlane.f32.xlu0 %v903
        %v905 = vpop.xlane.xlu0 %904
        %v906 = vsel %vm407, %v888, 0.0
        %907 = vadd.xlane.f32.xlu0 %v906
        %v908 = vpop.xlane.xlu0 %907
        %v909 = vsel %vm407, %v889, 0.0
        %910 = vadd.xlane.f32.xlu0 %v909
        %v911 = vpop.xlane.xlu0 %910
        %v912 = vsel %vm407, %v890, 0.0
        %913 = vadd.xlane.f32.xlu0 %v912
        %v914 = vpop.xlane.xlu0 %913
        %v915 = vmul.f32 %v893, %v438
        %v916 = vmul.f32 %v896, %v438
        %v917 = vmul.f32 %v899, %v438
        %v918 = vmul.f32 %v902, %v438
        %v919 = vmul.f32 %v905, %v438
        %v920 = vmul.f32 %v908, %v438
        %v921 = vmul.f32 %v911, %v438
        %v922 = vmul.f32 %v914, %v438
        %v923 = vadd.f32 %v915, 1e-05
        %v924 = vadd.f32 %v916, 1e-05
        %v925 = vadd.f32 %v917, 1e-05
        %v926 = vadd.f32 %v918, 1e-05
        %v927 = vadd.f32 %v919, 1e-05
        %v928 = vadd.f32 %v920, 1e-05
        %v929 = vadd.f32 %v921, 1e-05
        %v930 = vadd.f32 %v922, 1e-05
        %v931 = vrsqrt.pop %v923
        %v932 = vmul.f32 %v931, %v923
        %v933 = vmul.f32 %v932, %v931
        %v934 = vmul.f32 0.5, %v933
        %v935 = vsub.f32 1.5, %v934
        %v936 = vmul.f32 %v931, %v935
        %vm937 = vweird.f32 %v923
        %vm938 = vweird.f32 %v931
        %vm939 = vmor %vm937, %vm938
        %v940 = vsel %vm939, %v931, %v936
        %v941 = vrsqrt.pop %v924
        %v942 = vmul.f32 %v941, %v924
        %v943 = vmul.f32 %v942, %v941
        %v944 = vmul.f32 0.5, %v943
        %v945 = vsub.f32 1.5, %v944
        %v946 = vmul.f32 %v941, %v945
        %vm947 = vweird.f32 %v924
        %vm948 = vweird.f32 %v941
        %vm949 = vmor %vm947, %vm948
        %v950 = vsel %vm949, %v941, %v946
        %v951 = vrsqrt.pop %v925
        %v952 = vmul.f32 %v951, %v925
        %v953 = vmul.f32 %v952, %v951
        %v954 = vmul.f32 0.5, %v953
        %v955 = vsub.f32 1.5, %v954
        %v956 = vmul.f32 %v951, %v955
        %vm957 = vweird.f32 %v925
        %vm958 = vweird.f32 %v951
        %vm959 = vmor %vm957, %vm958
        %v960 = vsel %vm959, %v951, %v956
        %v961 = vrsqrt.pop %v926
        %v962 = vmul.f32 %v961, %v926
        %v963 = vmul.f32 %v962, %v961
        %v964 = vmul.f32 0.5, %v963
        %v965 = vsub.f32 1.5, %v964
        %v966 = vmul.f32 %v961, %v965
        %vm967 = vweird.f32 %v926
        %vm968 = vweird.f32 %v961
        %vm969 = vmor %vm967, %vm968
        %v970 = vsel %vm969, %v961, %v966
        %v971 = vrsqrt.pop %v927
        %v972 = vmul.f32 %v971, %v927
        %v973 = vmul.f32 %v972, %v971
        %v974 = vmul.f32 0.5, %v973
        %v975 = vsub.f32 1.5, %v974
        %v976 = vmul.f32 %v971, %v975
        %vm977 = vweird.f32 %v927
        %vm978 = vweird.f32 %v971
        %vm979 = vmor %vm977, %vm978
        %v980 = vsel %vm979, %v971, %v976
        %v981 = vrsqrt.pop %v928
        %v982 = vmul.f32 %v981, %v928
        %v983 = vmul.f32 %v982, %v981
        %v984 = vmul.f32 0.5, %v983
        %v985 = vsub.f32 1.5, %v984
        %v986 = vmul.f32 %v981, %v985
        %vm987 = vweird.f32 %v928
        %vm988 = vweird.f32 %v981
        %vm989 = vmor %vm987, %vm988
        %v990 = vsel %vm989, %v981, %v986
        %v991 = vrsqrt.pop %v929
        %v992 = vmul.f32 %v991, %v929
        %v993 = vmul.f32 %v992, %v991
        %v994 = vmul.f32 0.5, %v993
        %v995 = vsub.f32 1.5, %v994
        %v996 = vmul.f32 %v991, %v995
        %vm997 = vweird.f32 %v929
        %vm998 = vweird.f32 %v991
        %vm999 = vmor %vm997, %vm998
        %v1000 = vsel %vm999, %v991, %v996
        %v1001 = vrsqrt.pop %v930
        %v1002 = vmul.f32 %v1001, %v930
        %v1003 = vmul.f32 %v1002, %v1001
        %v1004 = vmul.f32 0.5, %v1003
        %v1005 = vsub.f32 1.5, %v1004
        %v1006 = vmul.f32 %v1001, %v1005
        %vm1007 = vweird.f32 %v930
        %vm1008 = vweird.f32 %v1001
        %vm1009 = vmor %vm1007, %vm1008
        %v1010 = vsel %vm1009, %v1001, %v1006
        %v1011 = vmul.f32 %v875, %v940
        %v1012 = vmul.f32 %v876, %v950
        %v1013 = vmul.f32 %v877, %v960
        %v1014 = vmul.f32 %v878, %v970
        %v1015 = vmul.f32 %v879, %v980
        %v1016 = vmul.f32 %v880, %v990
        %v1017 = vmul.f32 %v881, %v1000
        %v1018 = vmul.f32 %v882, %v1010
        %v1019 = vperm.slane %v269, 4
        %v1020 = vmul.f32 %v1011, %v1019
        %v1021 = vmul.f32 %v1012, %v1019
        %v1022 = vmul.f32 %v1013, %v1019
        %v1023 = vmul.f32 %v1014, %v1019
        %v1024 = vmul.f32 %v1015, %v1019
        %v1025 = vmul.f32 %v1016, %v1019
        %v1026 = vmul.f32 %v1017, %v1019
        %v1027 = vmul.f32 %v1018, %v1019
        %v1028 = vperm.slane %v269, 7
        %v1029 = vadd.f32 %v1020, %v1028
        %v1030 = vadd.f32 %v1021, %v1028
        %v1031 = vadd.f32 %v1022, %v1028
        %v1032 = vadd.f32 %v1023, %v1028
        %v1033 = vadd.f32 %v1024, %v1028
        %v1034 = vadd.f32 %v1025, %v1028
        %v1035 = vadd.f32 %v1026, %v1028
        %v1036 = vadd.f32 %v1027, %v1028
        %v1037 = vmax.f32 %v1029, 0.0
        %v1038 = vmax.f32 %v1030, 0.0
        %v1039 = vmax.f32 %v1031, 0.0
        %v1040 = vmax.f32 %v1032, 0.0
        %v1041 = vmax.f32 %v1033, 0.0
        %v1042 = vmax.f32 %v1034, 0.0
        %v1043 = vmax.f32 %v1035, 0.0
        %v1044 = vmax.f32 %v1036, 0.0
        %v1045 = vadd.f32 %v1037, %v278
        %v1046 = vadd.f32 %v1038, %v285
        %v1047 = vadd.f32 %v1039, %v292
        %v1048 = vadd.f32 %v1040, %v299
        %v1049 = vadd.f32 %v1041, %v306
        %v1050 = vadd.f32 %v1042, %v313
        %v1051 = vadd.f32 %v1043, %v320
        %v1052 = vadd.f32 %v1044, %v327
        %v1053 = vsel %vm407, %v1045, -inf
        %v1054 = vrot.slane %v1053, 4
        %v1055 = vmax.f32 %v1053, %v1054
        %v1056 = vrot.slane %v1055, 2
        %v1057 = vmax.f32 %v1055, %v1056
        %v1058 = vrot.slane %v1057, 1
        %v1059 = vmax.f32 %v1057, %v1058
        %v1060 = vsel %vm407, %v1046, -inf
        %v1061 = vrot.slane %v1060, 4
        %v1062 = vmax.f32 %v1060, %v1061
        %v1063 = vrot.slane %v1062, 2
        %v1064 = vmax.f32 %v1062, %v1063
        %v1065 = vrot.slane %v1064, 1
        %v1066 = vmax.f32 %v1064, %v1065
        %v1067 = vsel %vm407, %v1047, -inf
        %v1068 = vrot.slane %v1067, 4
        %v1069 = vmax.f32 %v1067, %v1068
        %v1070 = vrot.slane %v1069, 2
        %v1071 = vmax.f32 %v1069, %v1070
        %v1072 = vrot.slane %v1071, 1
        %v1073 = vmax.f32 %v1071, %v1072
        %v1074 = vsel %vm407, %v1048, -inf
        %v1075 = vrot.slane %v1074, 4
        %v1076 = vmax.f32 %v1074, %v1075
        %v1077 = vrot.slane %v1076, 2
        %v1078 = vmax.f32 %v1076, %v1077
        %v1079 = vrot.slane %v1078, 1
        %v1080 = vmax.f32 %v1078, %v1079
        %v1081 = vsel %vm407, %v1049, -inf
        %v1082 = vrot.slane %v1081, 4
        %v1083 = vmax.f32 %v1081, %v1082
        %v1084 = vrot.slane %v1083, 2
        %v1085 = vmax.f32 %v1083, %v1084
        %v1086 = vrot.slane %v1085, 1
        %v1087 = vmax.f32 %v1085, %v1086
        %v1088 = vsel %vm407, %v1050, -inf
        %v1089 = vrot.slane %v1088, 4
        %v1090 = vmax.f32 %v1088, %v1089
        %v1091 = vrot.slane %v1090, 2
        %v1092 = vmax.f32 %v1090, %v1091
        %v1093 = vrot.slane %v1092, 1
        %v1094 = vmax.f32 %v1092, %v1093
        %v1095 = vsel %vm407, %v1051, -inf
        %v1096 = vrot.slane %v1095, 4
        %v1097 = vmax.f32 %v1095, %v1096
        %v1098 = vrot.slane %v1097, 2
        %v1099 = vmax.f32 %v1097, %v1098
        %v1100 = vrot.slane %v1099, 1
        %v1101 = vmax.f32 %v1099, %v1100
        %v1102 = vsel %vm407, %v1052, -inf
        %v1103 = vrot.slane %v1102, 4
        %v1104 = vmax.f32 %v1102, %v1103
        %v1105 = vrot.slane %v1104, 2
        %v1106 = vmax.f32 %v1104, %v1105
        %v1107 = vrot.slane %v1106, 1
        %v1108 = vmax.f32 %v1106, %v1107
        %v1109 = vmax.f32 %v1059, 0.0
        %v1110 = vmax.f32 %v1066, 0.0
        %v1111 = vmax.f32 %v1073, 0.0
        %v1112 = vmax.f32 %v1080, 0.0
        %v1113 = vmax.f32 %v1087, 0.0
        %v1114 = vmax.f32 %v1094, 0.0
        %v1115 = vmax.f32 %v1101, 0.0
        %v1116 = vmax.f32 %v1108, 0.0
        %s1117 = scalar_lea.vmem %s3, 16
        %v1118 = vld [vmem:[%s1117] sm:$0xff]
        %v1119 = vld [vmem:[%s1117 + $0x8] sm:$0xff]
        %v1121 = vsel %vm407, %v1037, 0
        %v1124 = vsel %vm407, %v1038, 0
        %v1127 = vsel %vm407, %v1039, 0
        %v1130 = vsel %vm407, %v1040, 0
        %v1133 = vsel %vm407, %v1041, 0
        %v1136 = vsel %vm407, %v1042, 0
        %v1139 = vsel %vm407, %v1043, 0
        %v1142 = vsel %vm407, %v1044, 0
        %1144 = vmatpush.msra.mxu0 0.0
        %1145 = vmatpush.msra.mxu0 0.0
        %1146 = vmatpush.msra.mxu0 0.0
        %1147 = vmatpush.msra.mxu0 0.0
        %1148 = vmatpush.msra.mxu0 0.0
        %1149 = vmatpush.msra.mxu0 0.0
        %1150 = vmatpush.msra.mxu0 0.0
        %1151 = vmatpush.msra.mxu0 0.0
        %1152 = vmatpush.msra.mxu0 0.0
        %1153 = vmatpush.msra.mxu0 0.0
        %1154 = vmatpush.msra.mxu0 0.0
        %1155 = vmatpush.msra.mxu0 0.0
        %1156 = vmatpush.msra.mxu0 0.0
        %1157 = vmatpush.msra.mxu0 0.0
        %1158 = vmatpush.msra.mxu0 %v1119
        %1159 = vmatpush.msra.mxu0 %v1118
        %1160 = vmatmul.f32.gmra.mxu0 %v1121
        %v1161 = vpop.f32.mrf.mxu0
        %v1162 = vadd.f32 0.0, %v1161
        %1163 = vmatmul.f32.gmra.mxu0 %v1124
        %v1164 = vpop.f32.mrf.mxu0
        %v1165 = vadd.f32 0.0, %v1164
        %1166 = vmatmul.f32.gmra.mxu0 %v1127
        %v1167 = vpop.f32.mrf.mxu0
        %v1168 = vadd.f32 0.0, %v1167
        %1169 = vmatmul.f32.gmra.mxu0 %v1130
        %v1170 = vpop.f32.mrf.mxu0
        %v1171 = vadd.f32 0.0, %v1170
        %1172 = vmatmul.f32.gmra.mxu0 %v1133
        %v1173 = vpop.f32.mrf.mxu0
        %v1174 = vadd.f32 0.0, %v1173
        %1175 = vmatmul.f32.gmra.mxu0 %v1136
        %v1176 = vpop.f32.mrf.mxu0
        %v1177 = vadd.f32 0.0, %v1176
        %1178 = vmatmul.f32.gmra.mxu0 %v1139
        %v1179 = vpop.f32.mrf.mxu0
        %v1180 = vadd.f32 0.0, %v1179
        %1181 = vmatmul.f32.gmra.mxu0 %v1142
        %v1182 = vpop.f32.mrf.mxu0
        %v1183 = vadd.f32 0.0, %v1182
        %1184 = vdwg.mxu0
        %s1185 = scalar_lea.vmem %s4, 16
        %v1186 = vld [vmem:[%s1185] sm:$0xff]
        %v1187 = vld [vmem:[%s1185 + $0x8] sm:$0xff]
        %v1196 = vsel %vm766, %v1110, %v1109
        %v1197 = vsel %vm768, %v1111, %v1196
        %v1198 = vsel %vm770, %v1112, %v1197
        %v1199 = vsel %vm772, %v1113, %v1198
        %v1200 = vsel %vm774, %v1114, %v1199
        %v1201 = vsel %vm776, %v1115, %v1200
        %v1202 = vsel %vm778, %v1116, %v1201
        %v1203 = vsel %vm407, %v1202, 0
        %1205 = vmatpush.msra.mxu0 0.0
        %1206 = vmatpush.msra.mxu0 0.0
        %1207 = vmatpush.msra.mxu0 0.0
        %1208 = vmatpush.msra.mxu0 0.0
        %1209 = vmatpush.msra.mxu0 0.0
        %1210 = vmatpush.msra.mxu0 0.0
        %1211 = vmatpush.msra.mxu0 0.0
        %1212 = vmatpush.msra.mxu0 0.0
        %1213 = vmatpush.msra.mxu0 0.0
        %1214 = vmatpush.msra.mxu0 0.0
        %1215 = vmatpush.msra.mxu0 0.0
        %1216 = vmatpush.msra.mxu0 0.0
        %1217 = vmatpush.msra.mxu0 0.0
        %1218 = vmatpush.msra.mxu0 0.0
        %1219 = vmatpush.msra.mxu0 %v1187
        %1220 = vmatpush.msra.mxu0 %v1186
        %1221 = vmatmul.f32.gmra.mxu0 %v1203
        %v1222 = vpop.f32.mrf.mxu0
        %v1223 = vadd.f32 0.0, %v1222
        %1224 = vdwg.mxu0
        %v1226 = vrot.slane %v1223, 1
        %v1227 = vrot.slane %v1223, 2
        %v1228 = vrot.slane %v1223, 3
        %v1229 = vrot.slane %v1223, 4
        %v1230 = vrot.slane %v1223, 5
        %v1231 = vrot.slane %v1223, 6
        %v1232 = vrot.slane %v1223, 7
        %v1233 = vperm.slane %v1223, 0
        %v1234 = vperm.slane %v1226, 0
        %v1235 = vperm.slane %v1227, 0
        %v1236 = vperm.slane %v1228, 0
        %v1237 = vperm.slane %v1229, 0
        %v1238 = vperm.slane %v1230, 0
        %v1239 = vperm.slane %v1231, 0
        %v1240 = vperm.slane %v1232, 0
        %v1249 = vadd.f32 %v1162, %v1233
        %v1250 = vadd.f32 %v1165, %v1234
        %v1251 = vadd.f32 %v1168, %v1235
        %v1252 = vadd.f32 %v1171, %v1236
        %v1253 = vadd.f32 %v1174, %v1237
        %v1254 = vadd.f32 %v1177, %v1238
        %v1255 = vadd.f32 %v1180, %v1239
        %v1256 = vadd.f32 %v1183, %v1240
        %v1257 = vperm.slane %v269, 2
        %v1258 = vadd.f32 %v1249, %v1257
        %v1259 = vadd.f32 %v1250, %v1257
        %v1260 = vadd.f32 %v1251, %v1257
        %v1261 = vadd.f32 %v1252, %v1257
        %v1262 = vadd.f32 %v1253, %v1257
        %v1263 = vadd.f32 %v1254, %v1257
        %v1264 = vadd.f32 %v1255, %v1257
        %v1265 = vadd.f32 %v1256, %v1257
        %v1266 = vsel %vm407, %v1258, 0.0
        %1267 = vadd.xlane.f32.xlu0 %v1266
        %v1268 = vpop.xlane.xlu0 %1267
        %v1269 = vsel %vm407, %v1259, 0.0
        %1270 = vadd.xlane.f32.xlu0 %v1269
        %v1271 = vpop.xlane.xlu0 %1270
        %v1272 = vsel %vm407, %v1260, 0.0
        %1273 = vadd.xlane.f32.xlu0 %v1272
        %v1274 = vpop.xlane.xlu0 %1273
        %v1275 = vsel %vm407, %v1261, 0.0
        %1276 = vadd.xlane.f32.xlu0 %v1275
        %v1277 = vpop.xlane.xlu0 %1276
        %v1278 = vsel %vm407, %v1262, 0.0
        %1279 = vadd.xlane.f32.xlu0 %v1278
        %v1280 = vpop.xlane.xlu0 %1279
        %v1281 = vsel %vm407, %v1263, 0.0
        %1282 = vadd.xlane.f32.xlu0 %v1281
        %v1283 = vpop.xlane.xlu0 %1282
        %v1284 = vsel %vm407, %v1264, 0.0
        %1285 = vadd.xlane.f32.xlu0 %v1284
        %v1286 = vpop.xlane.xlu0 %1285
        %v1287 = vsel %vm407, %v1265, 0.0
        %1288 = vadd.xlane.f32.xlu0 %v1287
        %v1289 = vpop.xlane.xlu0 %1288
        %v1290 = vmul.f32 %v1268, %v438
        %v1291 = vmul.f32 %v1271, %v438
        %v1292 = vmul.f32 %v1274, %v438
        %v1293 = vmul.f32 %v1277, %v438
        %v1294 = vmul.f32 %v1280, %v438
        %v1295 = vmul.f32 %v1283, %v438
        %v1296 = vmul.f32 %v1286, %v438
        %v1297 = vmul.f32 %v1289, %v438
        %v1298 = vsub.f32 %v1258, %v1290
        %v1299 = vsub.f32 %v1259, %v1291
        %v1300 = vsub.f32 %v1260, %v1292
        %v1301 = vsub.f32 %v1261, %v1293
        %v1302 = vsub.f32 %v1262, %v1294
        %v1303 = vsub.f32 %v1263, %v1295
        %v1304 = vsub.f32 %v1264, %v1296
        %v1305 = vsub.f32 %v1265, %v1297
        %v1306 = vmul.f32 %v1298, %v1298
        %v1307 = vmul.f32 %v1299, %v1299
        %v1308 = vmul.f32 %v1300, %v1300
        %v1309 = vmul.f32 %v1301, %v1301
        %v1310 = vmul.f32 %v1302, %v1302
        %v1311 = vmul.f32 %v1303, %v1303
        %v1312 = vmul.f32 %v1304, %v1304
        %v1313 = vmul.f32 %v1305, %v1305
        %v1314 = vsel %vm407, %v1306, 0.0
        %1315 = vadd.xlane.f32.xlu0 %v1314
        %v1316 = vpop.xlane.xlu0 %1315
        %v1317 = vsel %vm407, %v1307, 0.0
        %1318 = vadd.xlane.f32.xlu0 %v1317
        %v1319 = vpop.xlane.xlu0 %1318
        %v1320 = vsel %vm407, %v1308, 0.0
        %1321 = vadd.xlane.f32.xlu0 %v1320
        %v1322 = vpop.xlane.xlu0 %1321
        %v1323 = vsel %vm407, %v1309, 0.0
        %1324 = vadd.xlane.f32.xlu0 %v1323
        %v1325 = vpop.xlane.xlu0 %1324
        %v1326 = vsel %vm407, %v1310, 0.0
        %1327 = vadd.xlane.f32.xlu0 %v1326
        %v1328 = vpop.xlane.xlu0 %1327
        %v1329 = vsel %vm407, %v1311, 0.0
        %1330 = vadd.xlane.f32.xlu0 %v1329
        %v1331 = vpop.xlane.xlu0 %1330
        %v1332 = vsel %vm407, %v1312, 0.0
        %1333 = vadd.xlane.f32.xlu0 %v1332
        %v1334 = vpop.xlane.xlu0 %1333
        %v1335 = vsel %vm407, %v1313, 0.0
        %1336 = vadd.xlane.f32.xlu0 %v1335
        %v1337 = vpop.xlane.xlu0 %1336
        %v1338 = vmul.f32 %v1316, %v438
        %v1339 = vmul.f32 %v1319, %v438
        %v1340 = vmul.f32 %v1322, %v438
        %v1341 = vmul.f32 %v1325, %v438
        %v1342 = vmul.f32 %v1328, %v438
        %v1343 = vmul.f32 %v1331, %v438
        %v1344 = vmul.f32 %v1334, %v438
        %v1345 = vmul.f32 %v1337, %v438
        %v1346 = vadd.f32 %v1338, 1e-05
        %v1347 = vadd.f32 %v1339, 1e-05
        %v1348 = vadd.f32 %v1340, 1e-05
        %v1349 = vadd.f32 %v1341, 1e-05
        %v1350 = vadd.f32 %v1342, 1e-05
        %v1351 = vadd.f32 %v1343, 1e-05
        %v1352 = vadd.f32 %v1344, 1e-05
        %v1353 = vadd.f32 %v1345, 1e-05
        %v1354 = vrsqrt.pop %v1346
        %v1355 = vmul.f32 %v1354, %v1346
        %v1356 = vmul.f32 %v1355, %v1354
        %v1357 = vmul.f32 0.5, %v1356
        %v1358 = vsub.f32 1.5, %v1357
        %v1359 = vmul.f32 %v1354, %v1358
        %vm1360 = vweird.f32 %v1346
        %vm1361 = vweird.f32 %v1354
        %vm1362 = vmor %vm1360, %vm1361
        %v1363 = vsel %vm1362, %v1354, %v1359
        %v1364 = vrsqrt.pop %v1347
        %v1365 = vmul.f32 %v1364, %v1347
        %v1366 = vmul.f32 %v1365, %v1364
        %v1367 = vmul.f32 0.5, %v1366
        %v1368 = vsub.f32 1.5, %v1367
        %v1369 = vmul.f32 %v1364, %v1368
        %vm1370 = vweird.f32 %v1347
        %vm1371 = vweird.f32 %v1364
        %vm1372 = vmor %vm1370, %vm1371
        %v1373 = vsel %vm1372, %v1364, %v1369
        %v1374 = vrsqrt.pop %v1348
        %v1375 = vmul.f32 %v1374, %v1348
        %v1376 = vmul.f32 %v1375, %v1374
        %v1377 = vmul.f32 0.5, %v1376
        %v1378 = vsub.f32 1.5, %v1377
        %v1379 = vmul.f32 %v1374, %v1378
        %vm1380 = vweird.f32 %v1348
        %vm1381 = vweird.f32 %v1374
        %vm1382 = vmor %vm1380, %vm1381
        %v1383 = vsel %vm1382, %v1374, %v1379
        %v1384 = vrsqrt.pop %v1349
        %v1385 = vmul.f32 %v1384, %v1349
        %v1386 = vmul.f32 %v1385, %v1384
        %v1387 = vmul.f32 0.5, %v1386
        %v1388 = vsub.f32 1.5, %v1387
        %v1389 = vmul.f32 %v1384, %v1388
        %vm1390 = vweird.f32 %v1349
        %vm1391 = vweird.f32 %v1384
        %vm1392 = vmor %vm1390, %vm1391
        %v1393 = vsel %vm1392, %v1384, %v1389
        %v1394 = vrsqrt.pop %v1350
        %v1395 = vmul.f32 %v1394, %v1350
        %v1396 = vmul.f32 %v1395, %v1394
        %v1397 = vmul.f32 0.5, %v1396
        %v1398 = vsub.f32 1.5, %v1397
        %v1399 = vmul.f32 %v1394, %v1398
        %vm1400 = vweird.f32 %v1350
        %vm1401 = vweird.f32 %v1394
        %vm1402 = vmor %vm1400, %vm1401
        %v1403 = vsel %vm1402, %v1394, %v1399
        %v1404 = vrsqrt.pop %v1351
        %v1405 = vmul.f32 %v1404, %v1351
        %v1406 = vmul.f32 %v1405, %v1404
        %v1407 = vmul.f32 0.5, %v1406
        %v1408 = vsub.f32 1.5, %v1407
        %v1409 = vmul.f32 %v1404, %v1408
        %vm1410 = vweird.f32 %v1351
        %vm1411 = vweird.f32 %v1404
        %vm1412 = vmor %vm1410, %vm1411
        %v1413 = vsel %vm1412, %v1404, %v1409
        %v1414 = vrsqrt.pop %v1352
        %v1415 = vmul.f32 %v1414, %v1352
        %v1416 = vmul.f32 %v1415, %v1414
        %v1417 = vmul.f32 0.5, %v1416
        %v1418 = vsub.f32 1.5, %v1417
        %v1419 = vmul.f32 %v1414, %v1418
        %vm1420 = vweird.f32 %v1352
        %vm1421 = vweird.f32 %v1414
        %vm1422 = vmor %vm1420, %vm1421
        %v1423 = vsel %vm1422, %v1414, %v1419
        %v1424 = vrsqrt.pop %v1353
        %v1425 = vmul.f32 %v1424, %v1353
        %v1426 = vmul.f32 %v1425, %v1424
        %v1427 = vmul.f32 0.5, %v1426
        %v1428 = vsub.f32 1.5, %v1427
        %v1429 = vmul.f32 %v1424, %v1428
        %vm1430 = vweird.f32 %v1353
        %vm1431 = vweird.f32 %v1424
        %vm1432 = vmor %vm1430, %vm1431
        %v1433 = vsel %vm1432, %v1424, %v1429
        %v1434 = vmul.f32 %v1298, %v1363
        %v1435 = vmul.f32 %v1299, %v1373
        %v1436 = vmul.f32 %v1300, %v1383
        %v1437 = vmul.f32 %v1301, %v1393
        %v1438 = vmul.f32 %v1302, %v1403
        %v1439 = vmul.f32 %v1303, %v1413
        %v1440 = vmul.f32 %v1304, %v1423
        %v1441 = vmul.f32 %v1305, %v1433
        %v1442 = vperm.slane %v269, 5
        %v1443 = vmul.f32 %v1434, %v1442
        %v1444 = vmul.f32 %v1435, %v1442
        %v1445 = vmul.f32 %v1436, %v1442
        %v1446 = vmul.f32 %v1437, %v1442
        %v1447 = vmul.f32 %v1438, %v1442
        %v1448 = vmul.f32 %v1439, %v1442
        %v1449 = vmul.f32 %v1440, %v1442
        %v1450 = vmul.f32 %v1441, %v1442
        %v1451 = vperm.slane %v270, 0
        %v1452 = vadd.f32 %v1443, %v1451
        %v1453 = vadd.f32 %v1444, %v1451
        %v1454 = vadd.f32 %v1445, %v1451
        %v1455 = vadd.f32 %v1446, %v1451
        %v1456 = vadd.f32 %v1447, %v1451
        %v1457 = vadd.f32 %v1448, %v1451
        %v1458 = vadd.f32 %v1449, %v1451
        %v1459 = vadd.f32 %v1450, %v1451
        %v1460 = vmax.f32 %v1452, 0.0
        %v1461 = vmax.f32 %v1453, 0.0
        %v1462 = vmax.f32 %v1454, 0.0
        %v1463 = vmax.f32 %v1455, 0.0
        %v1464 = vmax.f32 %v1456, 0.0
        %v1465 = vmax.f32 %v1457, 0.0
        %v1466 = vmax.f32 %v1458, 0.0
        %v1467 = vmax.f32 %v1459, 0.0
        %v1468 = vadd.f32 %v1460, %v278
        %v1469 = vadd.f32 %v1461, %v285
        %v1470 = vadd.f32 %v1462, %v292
        %v1471 = vadd.f32 %v1463, %v299
        %v1472 = vadd.f32 %v1464, %v306
        %v1473 = vadd.f32 %v1465, %v313
        %v1474 = vadd.f32 %v1466, %v320
        %v1475 = vadd.f32 %v1467, %v327
        %v1476 = vsel %vm407, %v1468, -inf
        %v1477 = vrot.slane %v1476, 4
        %v1478 = vmax.f32 %v1476, %v1477
        %v1479 = vrot.slane %v1478, 2
        %v1480 = vmax.f32 %v1478, %v1479
        %v1481 = vrot.slane %v1480, 1
        %v1482 = vmax.f32 %v1480, %v1481
        %v1483 = vsel %vm407, %v1469, -inf
        %v1484 = vrot.slane %v1483, 4
        %v1485 = vmax.f32 %v1483, %v1484
        %v1486 = vrot.slane %v1485, 2
        %v1487 = vmax.f32 %v1485, %v1486
        %v1488 = vrot.slane %v1487, 1
        %v1489 = vmax.f32 %v1487, %v1488
        %v1490 = vsel %vm407, %v1470, -inf
        %v1491 = vrot.slane %v1490, 4
        %v1492 = vmax.f32 %v1490, %v1491
        %v1493 = vrot.slane %v1492, 2
        %v1494 = vmax.f32 %v1492, %v1493
        %v1495 = vrot.slane %v1494, 1
        %v1496 = vmax.f32 %v1494, %v1495
        %v1497 = vsel %vm407, %v1471, -inf
        %v1498 = vrot.slane %v1497, 4
        %v1499 = vmax.f32 %v1497, %v1498
        %v1500 = vrot.slane %v1499, 2
        %v1501 = vmax.f32 %v1499, %v1500
        %v1502 = vrot.slane %v1501, 1
        %v1503 = vmax.f32 %v1501, %v1502
        %v1504 = vsel %vm407, %v1472, -inf
        %v1505 = vrot.slane %v1504, 4
        %v1506 = vmax.f32 %v1504, %v1505
        %v1507 = vrot.slane %v1506, 2
        %v1508 = vmax.f32 %v1506, %v1507
        %v1509 = vrot.slane %v1508, 1
        %v1510 = vmax.f32 %v1508, %v1509
        %v1511 = vsel %vm407, %v1473, -inf
        %v1512 = vrot.slane %v1511, 4
        %v1513 = vmax.f32 %v1511, %v1512
        %v1514 = vrot.slane %v1513, 2
        %v1515 = vmax.f32 %v1513, %v1514
        %v1516 = vrot.slane %v1515, 1
        %v1517 = vmax.f32 %v1515, %v1516
        %v1518 = vsel %vm407, %v1474, -inf
        %v1519 = vrot.slane %v1518, 4
        %v1520 = vmax.f32 %v1518, %v1519
        %v1521 = vrot.slane %v1520, 2
        %v1522 = vmax.f32 %v1520, %v1521
        %v1523 = vrot.slane %v1522, 1
        %v1524 = vmax.f32 %v1522, %v1523
        %v1525 = vsel %vm407, %v1475, -inf
        %v1526 = vrot.slane %v1525, 4
        %v1527 = vmax.f32 %v1525, %v1526
        %v1528 = vrot.slane %v1527, 2
        %v1529 = vmax.f32 %v1527, %v1528
        %v1530 = vrot.slane %v1529, 1
        %v1531 = vmax.f32 %v1529, %v1530
        %v1532 = vmax.f32 %v1482, 0.0
        %v1533 = vmax.f32 %v1489, 0.0
        %v1534 = vmax.f32 %v1496, 0.0
        %v1535 = vmax.f32 %v1503, 0.0
        %v1536 = vmax.f32 %v1510, 0.0
        %v1537 = vmax.f32 %v1517, 0.0
        %v1538 = vmax.f32 %v1524, 0.0
        %v1539 = vmax.f32 %v1531, 0.0
        %v1540 = vsel %vm407, %v1460, -inf
        %v1541 = vrot.slane %v1540, 4
        %v1542 = vmax.f32 %v1540, %v1541
        %v1543 = vrot.slane %v1542, 2
        %v1544 = vmax.f32 %v1542, %v1543
        %v1545 = vrot.slane %v1544, 1
        %v1546 = vmax.f32 %v1544, %v1545
        %v1547 = vsel %vm407, %v1461, -inf
        %v1548 = vrot.slane %v1547, 4
        %v1549 = vmax.f32 %v1547, %v1548
        %v1550 = vrot.slane %v1549, 2
        %v1551 = vmax.f32 %v1549, %v1550
        %v1552 = vrot.slane %v1551, 1
        %v1553 = vmax.f32 %v1551, %v1552
        %v1554 = vsel %vm407, %v1462, -inf
        %v1555 = vrot.slane %v1554, 4
        %v1556 = vmax.f32 %v1554, %v1555
        %v1557 = vrot.slane %v1556, 2
        %v1558 = vmax.f32 %v1556, %v1557
        %v1559 = vrot.slane %v1558, 1
        %v1560 = vmax.f32 %v1558, %v1559
        %v1561 = vsel %vm407, %v1463, -inf
        %v1562 = vrot.slane %v1561, 4
        %v1563 = vmax.f32 %v1561, %v1562
        %v1564 = vrot.slane %v1563, 2
        %v1565 = vmax.f32 %v1563, %v1564
        %v1566 = vrot.slane %v1565, 1
        %v1567 = vmax.f32 %v1565, %v1566
        %v1568 = vsel %vm407, %v1464, -inf
        %v1569 = vrot.slane %v1568, 4
        %v1570 = vmax.f32 %v1568, %v1569
        %v1571 = vrot.slane %v1570, 2
        %v1572 = vmax.f32 %v1570, %v1571
        %v1573 = vrot.slane %v1572, 1
        %v1574 = vmax.f32 %v1572, %v1573
        %v1575 = vsel %vm407, %v1465, -inf
        %v1576 = vrot.slane %v1575, 4
        %v1577 = vmax.f32 %v1575, %v1576
        %v1578 = vrot.slane %v1577, 2
        %v1579 = vmax.f32 %v1577, %v1578
        %v1580 = vrot.slane %v1579, 1
        %v1581 = vmax.f32 %v1579, %v1580
        %v1582 = vsel %vm407, %v1466, -inf
        %v1583 = vrot.slane %v1582, 4
        %v1584 = vmax.f32 %v1582, %v1583
        %v1585 = vrot.slane %v1584, 2
        %v1586 = vmax.f32 %v1584, %v1585
        %v1587 = vrot.slane %v1586, 1
        %v1588 = vmax.f32 %v1586, %v1587
        %v1589 = vsel %vm407, %v1467, -inf
        %v1590 = vrot.slane %v1589, 4
        %v1591 = vmax.f32 %v1589, %v1590
        %v1592 = vrot.slane %v1591, 2
        %v1593 = vmax.f32 %v1591, %v1592
        %v1594 = vrot.slane %v1593, 1
        %v1595 = vmax.f32 %v1593, %v1594
        %v1604 = vsel %vm766, %v1553, %v1546
        %v1605 = vsel %vm768, %v1560, %v1604
        %v1606 = vsel %vm770, %v1567, %v1605
        %v1607 = vsel %vm772, %v1574, %v1606
        %v1608 = vsel %vm774, %v1581, %v1607
        %v1609 = vsel %vm776, %v1588, %v1608
        %v1610 = vsel %vm778, %v1595, %v1609
        %1612 = vst.msk [vmem:[%s258] sm:$0xff] %vm407, %v1610
        %v1621 = vsel %vm766, %v1533, %v1532
        %v1622 = vsel %vm768, %v1534, %v1621
        %v1623 = vsel %vm770, %v1535, %v1622
        %v1624 = vsel %vm772, %v1536, %v1623
        %v1625 = vsel %vm774, %v1537, %v1624
        %v1626 = vsel %vm776, %v1538, %v1625
        %v1627 = vsel %vm778, %v1539, %v1626
        %1628 = vrot.lane.b32.xlu0 %v1627, 16
        %v1629 = vpop.permute.xlu0 %1628
        %vm1631 = vcmask 261248
        %1632 = vst.msk [vmem:[%s258] sm:$0xff] %vm1631, %v1629
        %s1633 = sand.u32 %s164, 1
        %s1634 = scalar_lea.sflag [#allocation3], %s1633
        %s1635 = sand.u32 %s164, 1
        %s1636 = smul.addr %s1635, 8
        %s1637 = scalar_lea.vmem [#allocation2], %s1636
        // Predicated region
        $region45: #{tpu_custom_call.1} parent=43 // pred_check
          %p1638 = pneg %p174
        $region46: #{tpu_custom_call.1} parent=43 // pred_check_branch
          %1640 = sbr.rel (%p1638) target = $region48
        $region47: #{tpu_custom_call.1} parent=43 // pred_region
          %1642 = vsyncadd %s1634, 0
          %s1643 = smul.addr %s20, 8
          %s1644 = scalar_lea.hbm %s6, %s1643
          %s1646 = sshll.u32 %s1637, 4
          %s1647 = int_to_ptr.vmem [resolvable:$true] %s1646
          %s1648 = sshll.u32 %s1644, 4
          %s1649 = int_to_ptr.hbm [resolvable:$true] %s1648
          %1651 = dma.vmem_to_hbm [thread:$0]  %s1647, 128, %s1649, %s1634
        $region48: #{tpu_custom_call.1} parent=43 // pred_fallthru
          _
      $region44: #{tpu_custom_call.1} parent=5 // pred_fallthru
        _
      %p1652 = scmp.le.s32.totalorder 2, %s15
      // Predicated region
      $region49: #{tpu_custom_call.1} parent=5 // pred_check
        %p1653 = pneg %p1652
      $region50: #{tpu_custom_call.1} parent=5 // pred_check_branch
        %1655 = sbr.rel (%p1653) target = $region52
      $region51: #{tpu_custom_call.1} parent=5 // pred_region
        %s1656 = ssub.s32 %s15, 2
        // Predicated region
        $region53: #{tpu_custom_call.1} parent=51 // pred_check
          %p1657 = pneg %p180
        $region54: #{tpu_custom_call.1} parent=51 // pred_check_branch
          %1659 = sbr.rel (%p1657) target = $region56
        $region55: #{tpu_custom_call.1} parent=51 // pred_region
          %s1660 = sand.u32 %s165, 1
          %s1661 = scalar_lea.sflag [#allocation3], %s1660
          %s1662 = sand.u32 %s165, 1
          %s1663 = smul.addr %s1662, 8
          %s1664 = scalar_lea.vmem [#allocation2], %s1663
          %1666 = dma.done %s1661, 128
        $region56: #{tpu_custom_call.1} parent=51 // pred_fallthru
          _
      $region52: #{tpu_custom_call.1} parent=5 // pred_fallthru
        _
    $region6: #{tpu_custom_call.1} parent=1 // loop_footer
      %s19 = sadd.s32 1, %s15
    $region7: #{tpu_custom_call.1} parent=1 // loop_footer_branch
      %14 = sbr.rel target = $region3
    $region8: #{tpu_custom_call.1} parent=1 // loop_exit
      _
    %1667 = vsyncpa [#allocation3], 1
    %s1668 = scalar_lea.sflag [#allocation3], 1
    %1669 = vsyncpa %s1668, 1

</llo_original>
